<compile_context>
chip_gen: v6e
topology: v6e:2x2x1
jax: 0.10.0
libtpu: 0.0.40
codegen_flags: <defaults>
</compile_context>

<pallas_src>
import jax
import jax.numpy as jnp
from jax import lax
from jax.experimental import pallas as pl
from jax.experimental.pallas import tpu as pltpu

KSIZE = 7
PAD = KSIZE // 2


# ----------------------------- helpers ------------------------------------ #
def _lane_shift(v, s):
    """result[..., p] = v[..., p + s] if 0 <= p + s < L else 0 (static s, zero fill)."""
    if s == 0:
        return v
    L = v.shape[-1]
    z = jnp.zeros(v.shape[:-1] + (abs(s),), v.dtype)
    if s > 0:
        return jnp.concatenate([v[..., s:], z], axis=-1)
    return jnp.concatenate([z, v[..., :L + s]], axis=-1)


def _pick_batch_tile(B, C, HW, target_bytes=1 << 20):
    """Batch tile: big blocks (to amortize per-step overhead) but >=2 grid steps."""
    per_b = C * HW * 4
    bt = max(1, min(B, target_bytes // max(per_b, 1)))
    if B >= 2:
        bt = min(bt, B // 2)          # keep both TensorCores busy on v7x
    bt = max(int(bt), 1)
    while B % bt:
        bt -= 1
    return bt


# ----------------------------- fused kernel -------------------------------- #
def _make_cbam_kernel(H, W):
    HW = H * W

    def kernel(x_ref, w1t_ref, w2_ref, wsp_ref, o_ref):
        # x_ref : (bt, C, HW)  VMEM, lane-dense on HW
        # w1t   : (C, C_hid)   VMEM  (= fc[0].weight.T)
        # w2    : (C, C_hid)   VMEM  (= fc[2].weight)
        # wsp   : (2*7*7,)     SMEM  flat [avg taps | max taps]
        x = x_ref[...]                                             # (bt, C, HW)
        bt, C, _ = x.shape

        # ---- channel attention: stats over HW, shared MLP on the VPU ------
        avg_c = jnp.sum(x, axis=-1, keepdims=True) * (1.0 / HW)    # (bt, C, 1)
        max_c = jnp.max(x, axis=-1, keepdims=True)                 # (bt, C, 1)
        v = jnp.concatenate([avg_c, max_c], axis=0)                # (2bt, C, 1)

        w1t = w1t_ref[...]                                         # (C, Ch)
        w2 = w2_ref[...]                                           # (C, Ch)
        h = jnp.sum(v * w1t[None, :, :], axis=1, keepdims=True)    # (2bt, 1, Ch)
        h = jnp.maximum(h, 0.0)                                    # ReLU
        logit = jnp.sum(h * w2[None, :, :], axis=-1, keepdims=True)  # (2bt, C, 1)
        att_c = jax.nn.sigmoid(logit[:bt] + logit[bt:])            # (bt, C, 1)
        x_ca = x * att_c                                           # (bt, C, HW)

        # ---- spatial attention: 7x7 conv via zero-filled lane shifts ------
        avg_s = jnp.sum(x_ca, axis=1, keepdims=True) * (1.0 / C)   # (bt, 1, HW)
        max_s = jnp.max(x_ca, axis=1, keepdims=True)               # (bt, 1, HW)
        m2 = jnp.concatenate([avg_s, max_s], axis=1)               # (bt, 2, HW)

        lane = lax.broadcasted_iota(jnp.int32, (1, 1, HW), 2)
        col_idx = lane % W                                         # output column index

        # 7 column-shifted (and column-masked) copies of both maps
        col_avg, col_max = [], []
        for dw in range(KSIZE):
            s = dw - PAD
            shifted = _lane_shift(m2, s)
            valid = jnp.logical_and(col_idx + s >= 0, col_idx + s < W)
            shifted = jnp.where(valid, shifted, 0.0)
            col_avg.append(shifted[:, 0:1, :])                     # (bt, 1, HW)
            col_max.append(shifted[:, 1:2, :])

        acc = jnp.zeros((bt, 1, HW), jnp.float32)
        for dh in range(KSIZE):
            inner = jnp.zeros((bt, 1, HW), jnp.float32)
            for dw in range(KSIZE):
                w_a = wsp_ref[dh * KSIZE + dw]                     # avg-map tap
                w_m = wsp_ref[KSIZE * KSIZE + dh * KSIZE + dw]     # max-map tap
                inner = inner + w_a * col_avg[dw] + w_m * col_max[dw]
            acc = acc + _lane_shift(inner, (dh - PAD) * W)         # whole-row shift

        att_s = jax.nn.sigmoid(acc)                                # (bt, 1, HW)
        o_ref[...] = x_ca * att_s

    return kernel


# ----------------------------- wrapper ------------------------------------ #
def cbam_pallas(x, w1, w2, wsp):
    """x: (B, C, H, W) f32.  w1: (C//16, C) = fc[0].weight.  w2: (C, C//16) = fc[2].weight.
    wsp: (2, 7, 7) = conv1.weight[0]."""
    B, C, H, W = x.shape
    HW = H * W
    C_hid = w1.shape[0]

    x_flat = x.reshape(B, C, HW)                         # free view of NCHW
    w1t = jnp.asarray(w1, jnp.float32).T                 # (C, C_hid)
    w2m = jnp.asarray(w2, jnp.float32)                   # (C, C_hid)
    wsp_flat = jnp.asarray(wsp, jnp.float32).reshape(2 * KSIZE * KSIZE)

    bt = _pick_batch_tile(B, C, HW)
    grid = (B // bt,)

    params = dict(dimension_semantics=("parallel",))
    vmem_need = 4 * bt * C * HW * 4 + (2 << 20)          # in+out double-buffered + slack
    if vmem_need > (32 << 20):
        params["vmem_limit_bytes"] = int(min(vmem_need, 100 << 20))

    out_flat = pl.pallas_call(
        _make_cbam_kernel(H, W),
        out_shape=jax.ShapeDtypeStruct((B, C, HW), jnp.float32),
        grid=grid,
        in_specs=[
            pl.BlockSpec((bt, C, HW), lambda i: (i, 0, 0)),
            pl.BlockSpec((C, C_hid), lambda i: (0, 0)),
            pl.BlockSpec((C, C_hid), lambda i: (0, 0)),
            pl.BlockSpec(memory_space=pltpu.MemorySpace.SMEM),
        ],
        out_specs=pl.BlockSpec((bt, C, HW), lambda i: (i, 0, 0)),
        compiler_params=pltpu.CompilerParams(**params),
    )(x_flat, w1t, w2m, wsp_flat)
    return out_flat.reshape(B, C, H, W)


# ----------------------------- reference ---------------------------------- #
def cbam_ref(x, w1, w2, wsp):
    avg = x.mean(axis=(2, 3))
    mx = x.max(axis=(2, 3))

    def fc(v):
        return jnp.maximum(v @ w1.T, 0.0) @ w2.T

    att_c = jax.nn.sigmoid(fc(avg) + fc(mx))
    x_ca = x * att_c[:, :, None, None]
    maps = jnp.concatenate([x_ca.mean(axis=1, keepdims=True),
                            x_ca.max(axis=1, keepdims=True)], axis=1)   # (B, 2, H, W)
    conv = lax.conv_general_dilated(
        maps, wsp[None], window_strides=(1, 1),
        padding=((PAD, PAD), (PAD, PAD)),
        dimension_numbers=("NCHW", "OIHW", "NCHW"))
    return x_ca * jax.nn.sigmoid(conv)


# ------------------------------- main -------------------------------------- #
if __name__ == "__main__":
    B, C, H, W = 2, 32, 16, 16          # in_channels must be >= 16 (in_planes // 16)
    C_hid = C // 16

    key = jax.random.PRNGKey(0)
    k1, k2, k3, kx = jax.random.split(key, 4)
    w1 = jax.random.normal(k1, (C_hid, C), jnp.float32) * 0.1      # fc[0].weight
    w2 = jax.random.normal(k2, (C, C_hid), jnp.float32) * 0.1      # fc[2].weight
    wsp = jax.random.normal(k3, (2, KSIZE, KSIZE), jnp.float32) * 0.1  # conv1.weight[0]
    x = jax.random.normal(kx, (B, C, H, W), jnp.float32)

    out = jax.block_until_ready(cbam_pallas(x, w1, w2, wsp))
    ref = cbam_ref(x, w1, w2, wsp)

    assert out.shape == (B, C, H, W)
    assert jnp.allclose(out, ref, rtol=2e-4, atol=2e-5), \
        f"max abs diff {jnp.max(jnp.abs(out - ref))}"
    print("KERNEL_OK")
</pallas_src>

<mosaic_0001>
module attributes {stable_mosaic.version = 11 : i64} {
  func.func @kernel(%arg0: i32, %arg1: memref<1x32x256xf32, #tpu.memory_space<vmem>>, %arg2: memref<32x2xf32, #tpu.memory_space<vmem>>, %arg3: memref<32x2xf32, #tpu.memory_space<vmem>>, %arg4: memref<98xf32, #tpu.memory_space<smem>>, %arg5: memref<1x32x256xf32, #tpu.memory_space<vmem>>) attributes {dimension_semantics = [#tpu.dimension_semantics<parallel>], iteration_bounds = array<i64: 2>, scalar_prefetch = 0 : i64, scratch_operands = 0 : i64, tpu.core_type = #tpu.core_type<tc>, window_params = [{transform_indices = @transform_0, window_bounds = array<i64: 1, 32, 256>}, {pipeline_mode = #tpu.pipeline_mode<synchronous>, transform_indices = @transform_1, window_bounds = array<i64: 32, 2>}, {pipeline_mode = #tpu.pipeline_mode<synchronous>, transform_indices = @transform_2, window_bounds = array<i64: 32, 2>}, {transform_indices = @transform_3, window_bounds = array<i64: 98>}, {transform_indices = @transform_4, window_bounds = array<i64: 1, 32, 256>}]} {
    %c0 = arith.constant 0 : index
    %c0_0 = arith.constant 0 : index
    %c0_1 = arith.constant 0 : index
    %0 = vector.load %arg1[%c0, %c0_0, %c0_1] : memref<1x32x256xf32, #tpu.memory_space<vmem>>, vector<1x32x256xf32>
    %cst = arith.constant dense<0.000000e+00> : vector<1x32xf32>
    %1 = vector.multi_reduction <add>, %0, %cst [2] : vector<1x32x256xf32> to vector<1x32xf32>
    %2 = vector.shape_cast %1 : vector<1x32xf32> to vector<1x32x1xf32>
    %cst_2 = arith.constant 3.906250e-03 : f32
    %3 = vector.broadcast %cst_2 : f32 to vector<1x32x1xf32>
    %4 = arith.mulf %2, %3 : vector<1x32x1xf32>
    %cst_3 = arith.constant dense<0xFF800000> : vector<1x32xf32>
    %5 = vector.multi_reduction <maximumf>, %0, %cst_3 [2] : vector<1x32x256xf32> to vector<1x32xf32>
    %6 = vector.shape_cast %5 : vector<1x32xf32> to vector<1x32x1xf32>
    %7 = tpu.concatenate %4, %6 in 0 : vector<1x32x1xf32>, vector<1x32x1xf32> -> vector<2x32x1xf32>
    %c0_4 = arith.constant 0 : index
    %c0_5 = arith.constant 0 : index
    %8 = vector.load %arg2[%c0_4, %c0_5] : memref<32x2xf32, #tpu.memory_space<vmem>>, vector<32x2xf32>
    %c0_6 = arith.constant 0 : index
    %c0_7 = arith.constant 0 : index
    %9 = vector.load %arg3[%c0_6, %c0_7] : memref<32x2xf32, #tpu.memory_space<vmem>>, vector<32x2xf32>
    %10 = vector.shape_cast %8 : vector<32x2xf32> to vector<1x32x2xf32>
    %11 = vector.broadcast %7 : vector<2x32x1xf32> to vector<2x32x2xf32>
    %12 = vector.broadcast %10 : vector<1x32x2xf32> to vector<2x32x2xf32>
    %13 = arith.mulf %11, %12 : vector<2x32x2xf32>
    %cst_8 = arith.constant dense<0.000000e+00> : vector<2x2xf32>
    %14 = vector.multi_reduction <add>, %13, %cst_8 [1] : vector<2x32x2xf32> to vector<2x2xf32>
    %15 = vector.shape_cast %14 : vector<2x2xf32> to vector<2x1x2xf32>
    %cst_9 = arith.constant 0.000000e+00 : f32
    %16 = vector.broadcast %cst_9 : f32 to vector<2x1x2xf32>
    %17 = arith.maximumf %15, %16 : vector<2x1x2xf32>
    %18 = vector.shape_cast %9 : vector<32x2xf32> to vector<1x32x2xf32>
    %19 = vector.broadcast %17 : vector<2x1x2xf32> to vector<2x32x2xf32>
    %20 = vector.broadcast %18 : vector<1x32x2xf32> to vector<2x32x2xf32>
    %21 = arith.mulf %19, %20 : vector<2x32x2xf32>
    %cst_10 = arith.constant dense<0.000000e+00> : vector<2x32xf32>
    %22 = vector.multi_reduction <add>, %21, %cst_10 [2] : vector<2x32x2xf32> to vector<2x32xf32>
    %23 = vector.shape_cast %22 : vector<2x32xf32> to vector<2x32x1xf32>
    %24 = vector.extract_strided_slice %23 {offsets = [0, 0, 0], sizes = [1, 32, 1], strides = [1, 1, 1]} : vector<2x32x1xf32> to vector<1x32x1xf32>
    %25 = vector.extract_strided_slice %23 {offsets = [1, 0, 0], sizes = [1, 32, 1], strides = [1, 1, 1]} : vector<2x32x1xf32> to vector<1x32x1xf32>
    %26 = arith.addf %24, %25 : vector<1x32x1xf32>
    %27 = arith.negf %26 : vector<1x32x1xf32>
    %28 = math.exp %27 : vector<1x32x1xf32>
    %cst_11 = arith.constant 1.000000e+00 : f32
    %29 = vector.broadcast %cst_11 : f32 to vector<1x32x1xf32>
    %30 = arith.addf %29, %28 : vector<1x32x1xf32>
    %31 = arith.divf %29, %30 : vector<1x32x1xf32>
    %32 = vector.broadcast %31 : vector<1x32x1xf32> to vector<1x32x256xf32>
    %33 = arith.mulf %0, %32 : vector<1x32x256xf32>
    %cst_12 = arith.constant dense<0.000000e+00> : vector<1x256xf32>
    %34 = vector.multi_reduction <add>, %33, %cst_12 [1] : vector<1x32x256xf32> to vector<1x256xf32>
    %35 = vector.shape_cast %34 : vector<1x256xf32> to vector<1x1x256xf32>
    %cst_13 = arith.constant 3.125000e-02 : f32
    %36 = vector.broadcast %cst_13 : f32 to vector<1x1x256xf32>
    %37 = arith.mulf %35, %36 : vector<1x1x256xf32>
    %cst_14 = arith.constant dense<0xFF800000> : vector<1x256xf32>
    %38 = vector.multi_reduction <maximumf>, %33, %cst_14 [1] : vector<1x32x256xf32> to vector<1x256xf32>
    %39 = vector.shape_cast %38 : vector<1x256xf32> to vector<1x1x256xf32>
    %40 = tpu.concatenate %37, %39 in 1 : vector<1x1x256xf32>, vector<1x1x256xf32> -> vector<1x2x256xf32>
    %41 = tpu.iota {dimensions = array<i32: 2>} : vector<1x1x256xi32>
    %c16_i32 = arith.constant 16 : i32
    %c0_i32 = arith.constant 0 : i32
    %42 = arith.cmpi eq, %c16_i32, %c0_i32 : i32
    %c1_i32 = arith.constant 1 : i32
    %43 = arith.select %42, %c1_i32, %c16_i32 : i32
    %44 = vector.broadcast %43 : i32 to vector<1x1x256xi32>
    %45 = arith.remsi %41, %44 : vector<1x1x256xi32>
    %c0_i32_15 = arith.constant 0 : i32
    %46 = vector.broadcast %c0_i32_15 : i32 to vector<1x1x256xi32>
    %47 = arith.cmpi ne, %45, %46 : vector<1x1x256xi32>
    %c0_i32_16 = arith.constant 0 : i32
    %48 = vector.broadcast %c0_i32_16 : i32 to vector<1x1x256xi32>
    %49 = arith.cmpi slt, %45, %48 : vector<1x1x256xi32>
    %c0_i32_17 = arith.constant 0 : i32
    %50 = arith.cmpi slt, %43, %c0_i32_17 : i32
    %51 = vector.broadcast %50 : i1 to vector<1x1x256xi1>
    %52 = vector.broadcast %51 : vector<1x1x256xi1> to vector<1x1x256xi1>
    %53 = arith.xori %49, %52 : vector<1x1x256xi1>
    %54 = arith.andi %53, %47 : vector<1x1x256xi1>
    %55 = vector.broadcast %43 : i32 to vector<1x1x256xi32>
    %56 = arith.addi %45, %55 : vector<1x1x256xi32>
    %57 = arith.select %54, %56, %45 : vector<1x1x256xi1>, vector<1x1x256xi32>
    %cst_18 = arith.constant 0.000000e+00 : f32
    %58 = vector.broadcast %cst_18 : f32 to vector<1x2x3xf32>
    %59 = vector.extract_strided_slice %40 {offsets = [0, 0, 0], sizes = [1, 2, 253], strides = [1, 1, 1]} : vector<1x2x256xf32> to vector<1x2x253xf32>
    %60 = tpu.concatenate %58, %59 in 2 : vector<1x2x3xf32>, vector<1x2x253xf32> -> vector<1x2x256xf32>
    %c-3_i32 = arith.constant -3 : i32
    %61 = vector.broadcast %c-3_i32 : i32 to vector<1x1x256xi32>
    %62 = arith.addi %57, %61 : vector<1x1x256xi32>
    %c0_i32_19 = arith.constant 0 : i32
    %63 = vector.broadcast %c0_i32_19 : i32 to vector<1x1x256xi32>
    %64 = arith.cmpi sge, %62, %63 : vector<1x1x256xi32>
    %c-3_i32_20 = arith.constant -3 : i32
    %65 = vector.broadcast %c-3_i32_20 : i32 to vector<1x1x256xi32>
    %66 = arith.addi %57, %65 : vector<1x1x256xi32>
    %c16_i32_21 = arith.constant 16 : i32
    %67 = vector.broadcast %c16_i32_21 : i32 to vector<1x1x256xi32>
    %68 = arith.cmpi slt, %66, %67 : vector<1x1x256xi32>
    %69 = arith.andi %64, %68 : vector<1x1x256xi1>
    %cst_22 = arith.constant 0.000000e+00 : f32
    %70 = vector.shape_cast %69 : vector<1x1x256xi1> to vector<1x1x256xi1>
    %71 = vector.broadcast %70 : vector<1x1x256xi1> to vector<1x2x256xi1>
    %72 = vector.broadcast %cst_22 : f32 to vector<1x2x256xf32>
    %73 = arith.select %71, %60, %72 : vector<1x2x256xi1>, vector<1x2x256xf32>
    %74 = vector.extract_strided_slice %73 {offsets = [0, 0, 0], sizes = [1, 1, 256], strides = [1, 1, 1]} : vector<1x2x256xf32> to vector<1x1x256xf32>
    %75 = vector.extract_strided_slice %73 {offsets = [0, 1, 0], sizes = [1, 1, 256], strides = [1, 1, 1]} : vector<1x2x256xf32> to vector<1x1x256xf32>
    %cst_23 = arith.constant 0.000000e+00 : f32
    %76 = vector.broadcast %cst_23 : f32 to vector<1x2x2xf32>
    %77 = vector.extract_strided_slice %40 {offsets = [0, 0, 0], sizes = [1, 2, 254], strides = [1, 1, 1]} : vector<1x2x256xf32> to vector<1x2x254xf32>
    %78 = tpu.concatenate %76, %77 in 2 : vector<1x2x2xf32>, vector<1x2x254xf32> -> vector<1x2x256xf32>
    %c-2_i32 = arith.constant -2 : i32
    %79 = vector.broadcast %c-2_i32 : i32 to vector<1x1x256xi32>
    %80 = arith.addi %57, %79 : vector<1x1x256xi32>
    %c0_i32_24 = arith.constant 0 : i32
    %81 = vector.broadcast %c0_i32_24 : i32 to vector<1x1x256xi32>
    %82 = arith.cmpi sge, %80, %81 : vector<1x1x256xi32>
    %c-2_i32_25 = arith.constant -2 : i32
    %83 = vector.broadcast %c-2_i32_25 : i32 to vector<1x1x256xi32>
    %84 = arith.addi %57, %83 : vector<1x1x256xi32>
    %c16_i32_26 = arith.constant 16 : i32
    %85 = vector.broadcast %c16_i32_26 : i32 to vector<1x1x256xi32>
    %86 = arith.cmpi slt, %84, %85 : vector<1x1x256xi32>
    %87 = arith.andi %82, %86 : vector<1x1x256xi1>
    %cst_27 = arith.constant 0.000000e+00 : f32
    %88 = vector.shape_cast %87 : vector<1x1x256xi1> to vector<1x1x256xi1>
    %89 = vector.broadcast %88 : vector<1x1x256xi1> to vector<1x2x256xi1>
    %90 = vector.broadcast %cst_27 : f32 to vector<1x2x256xf32>
    %91 = arith.select %89, %78, %90 : vector<1x2x256xi1>, vector<1x2x256xf32>
    %92 = vector.extract_strided_slice %91 {offsets = [0, 0, 0], sizes = [1, 1, 256], strides = [1, 1, 1]} : vector<1x2x256xf32> to vector<1x1x256xf32>
    %93 = vector.extract_strided_slice %91 {offsets = [0, 1, 0], sizes = [1, 1, 256], strides = [1, 1, 1]} : vector<1x2x256xf32> to vector<1x1x256xf32>
    %cst_28 = arith.constant 0.000000e+00 : f32
    %94 = vector.broadcast %cst_28 : f32 to vector<1x2x1xf32>
    %95 = vector.extract_strided_slice %40 {offsets = [0, 0, 0], sizes = [1, 2, 255], strides = [1, 1, 1]} : vector<1x2x256xf32> to vector<1x2x255xf32>
    %96 = tpu.concatenate %94, %95 in 2 : vector<1x2x1xf32>, vector<1x2x255xf32> -> vector<1x2x256xf32>
    %c-1_i32 = arith.constant -1 : i32
    %97 = vector.broadcast %c-1_i32 : i32 to vector<1x1x256xi32>
    %98 = arith.addi %57, %97 : vector<1x1x256xi32>
    %c0_i32_29 = arith.constant 0 : i32
    %99 = vector.broadcast %c0_i32_29 : i32 to vector<1x1x256xi32>
    %100 = arith.cmpi sge, %98, %99 : vector<1x1x256xi32>
    %c-1_i32_30 = arith.constant -1 : i32
    %101 = vector.broadcast %c-1_i32_30 : i32 to vector<1x1x256xi32>
    %102 = arith.addi %57, %101 : vector<1x1x256xi32>
    %c16_i32_31 = arith.constant 16 : i32
    %103 = vector.broadcast %c16_i32_31 : i32 to vector<1x1x256xi32>
    %104 = arith.cmpi slt, %102, %103 : vector<1x1x256xi32>
    %105 = arith.andi %100, %104 : vector<1x1x256xi1>
    %cst_32 = arith.constant 0.000000e+00 : f32
    %106 = vector.shape_cast %105 : vector<1x1x256xi1> to vector<1x1x256xi1>
    %107 = vector.broadcast %106 : vector<1x1x256xi1> to vector<1x2x256xi1>
    %108 = vector.broadcast %cst_32 : f32 to vector<1x2x256xf32>
    %109 = arith.select %107, %96, %108 : vector<1x2x256xi1>, vector<1x2x256xf32>
    %110 = vector.extract_strided_slice %109 {offsets = [0, 0, 0], sizes = [1, 1, 256], strides = [1, 1, 1]} : vector<1x2x256xf32> to vector<1x1x256xf32>
    %111 = vector.extract_strided_slice %109 {offsets = [0, 1, 0], sizes = [1, 1, 256], strides = [1, 1, 1]} : vector<1x2x256xf32> to vector<1x1x256xf32>
    %c0_i32_33 = arith.constant 0 : i32
    %112 = vector.broadcast %c0_i32_33 : i32 to vector<1x1x256xi32>
    %113 = arith.addi %57, %112 : vector<1x1x256xi32>
    %c0_i32_34 = arith.constant 0 : i32
    %114 = vector.broadcast %c0_i32_34 : i32 to vector<1x1x256xi32>
    %115 = arith.cmpi sge, %113, %114 : vector<1x1x256xi32>
    %c0_i32_35 = arith.constant 0 : i32
    %116 = vector.broadcast %c0_i32_35 : i32 to vector<1x1x256xi32>
    %117 = arith.addi %57, %116 : vector<1x1x256xi32>
    %c16_i32_36 = arith.constant 16 : i32
    %118 = vector.broadcast %c16_i32_36 : i32 to vector<1x1x256xi32>
    %119 = arith.cmpi slt, %117, %118 : vector<1x1x256xi32>
    %120 = arith.andi %115, %119 : vector<1x1x256xi1>
    %cst_37 = arith.constant 0.000000e+00 : f32
    %121 = vector.shape_cast %120 : vector<1x1x256xi1> to vector<1x1x256xi1>
    %122 = vector.broadcast %121 : vector<1x1x256xi1> to vector<1x2x256xi1>
    %123 = vector.broadcast %cst_37 : f32 to vector<1x2x256xf32>
    %124 = arith.select %122, %40, %123 : vector<1x2x256xi1>, vector<1x2x256xf32>
    %125 = vector.extract_strided_slice %124 {offsets = [0, 0, 0], sizes = [1, 1, 256], strides = [1, 1, 1]} : vector<1x2x256xf32> to vector<1x1x256xf32>
    %126 = vector.extract_strided_slice %124 {offsets = [0, 1, 0], sizes = [1, 1, 256], strides = [1, 1, 1]} : vector<1x2x256xf32> to vector<1x1x256xf32>
    %cst_38 = arith.constant 0.000000e+00 : f32
    %127 = vector.broadcast %cst_38 : f32 to vector<1x2x1xf32>
    %128 = vector.extract_strided_slice %40 {offsets = [0, 0, 1], sizes = [1, 2, 255], strides = [1, 1, 1]} : vector<1x2x256xf32> to vector<1x2x255xf32>
    %129 = tpu.concatenate %128, %127 in 2 : vector<1x2x255xf32>, vector<1x2x1xf32> -> vector<1x2x256xf32>
    %c1_i32_39 = arith.constant 1 : i32
    %130 = vector.broadcast %c1_i32_39 : i32 to vector<1x1x256xi32>
    %131 = arith.addi %57, %130 : vector<1x1x256xi32>
    %c0_i32_40 = arith.constant 0 : i32
    %132 = vector.broadcast %c0_i32_40 : i32 to vector<1x1x256xi32>
    %133 = arith.cmpi sge, %131, %132 : vector<1x1x256xi32>
    %c1_i32_41 = arith.constant 1 : i32
    %134 = vector.broadcast %c1_i32_41 : i32 to vector<1x1x256xi32>
    %135 = arith.addi %57, %134 : vector<1x1x256xi32>
    %c16_i32_42 = arith.constant 16 : i32
    %136 = vector.broadcast %c16_i32_42 : i32 to vector<1x1x256xi32>
    %137 = arith.cmpi slt, %135, %136 : vector<1x1x256xi32>
    %138 = arith.andi %133, %137 : vector<1x1x256xi1>
    %cst_43 = arith.constant 0.000000e+00 : f32
    %139 = vector.shape_cast %138 : vector<1x1x256xi1> to vector<1x1x256xi1>
    %140 = vector.broadcast %139 : vector<1x1x256xi1> to vector<1x2x256xi1>
    %141 = vector.broadcast %cst_43 : f32 to vector<1x2x256xf32>
    %142 = arith.select %140, %129, %141 : vector<1x2x256xi1>, vector<1x2x256xf32>
    %143 = vector.extract_strided_slice %142 {offsets = [0, 0, 0], sizes = [1, 1, 256], strides = [1, 1, 1]} : vector<1x2x256xf32> to vector<1x1x256xf32>
    %144 = vector.extract_strided_slice %142 {offsets = [0, 1, 0], sizes = [1, 1, 256], strides = [1, 1, 1]} : vector<1x2x256xf32> to vector<1x1x256xf32>
    %cst_44 = arith.constant 0.000000e+00 : f32
    %145 = vector.broadcast %cst_44 : f32 to vector<1x2x2xf32>
    %146 = vector.extract_strided_slice %40 {offsets = [0, 0, 2], sizes = [1, 2, 254], strides = [1, 1, 1]} : vector<1x2x256xf32> to vector<1x2x254xf32>
    %147 = tpu.concatenate %146, %145 in 2 : vector<1x2x254xf32>, vector<1x2x2xf32> -> vector<1x2x256xf32>
    %c2_i32 = arith.constant 2 : i32
    %148 = vector.broadcast %c2_i32 : i32 to vector<1x1x256xi32>
    %149 = arith.addi %57, %148 : vector<1x1x256xi32>
    %c0_i32_45 = arith.constant 0 : i32
    %150 = vector.broadcast %c0_i32_45 : i32 to vector<1x1x256xi32>
    %151 = arith.cmpi sge, %149, %150 : vector<1x1x256xi32>
    %c2_i32_46 = arith.constant 2 : i32
    %152 = vector.broadcast %c2_i32_46 : i32 to vector<1x1x256xi32>
    %153 = arith.addi %57, %152 : vector<1x1x256xi32>
    %c16_i32_47 = arith.constant 16 : i32
    %154 = vector.broadcast %c16_i32_47 : i32 to vector<1x1x256xi32>
    %155 = arith.cmpi slt, %153, %154 : vector<1x1x256xi32>
    %156 = arith.andi %151, %155 : vector<1x1x256xi1>
    %cst_48 = arith.constant 0.000000e+00 : f32
    %157 = vector.shape_cast %156 : vector<1x1x256xi1> to vector<1x1x256xi1>
    %158 = vector.broadcast %157 : vector<1x1x256xi1> to vector<1x2x256xi1>
    %159 = vector.broadcast %cst_48 : f32 to vector<1x2x256xf32>
    %160 = arith.select %158, %147, %159 : vector<1x2x256xi1>, vector<1x2x256xf32>
    %161 = vector.extract_strided_slice %160 {offsets = [0, 0, 0], sizes = [1, 1, 256], strides = [1, 1, 1]} : vector<1x2x256xf32> to vector<1x1x256xf32>
    %162 = vector.extract_strided_slice %160 {offsets = [0, 1, 0], sizes = [1, 1, 256], strides = [1, 1, 1]} : vector<1x2x256xf32> to vector<1x1x256xf32>
    %cst_49 = arith.constant 0.000000e+00 : f32
    %163 = vector.broadcast %cst_49 : f32 to vector<1x2x3xf32>
    %164 = vector.extract_strided_slice %40 {offsets = [0, 0, 3], sizes = [1, 2, 253], strides = [1, 1, 1]} : vector<1x2x256xf32> to vector<1x2x253xf32>
    %165 = tpu.concatenate %164, %163 in 2 : vector<1x2x253xf32>, vector<1x2x3xf32> -> vector<1x2x256xf32>
    %c3_i32 = arith.constant 3 : i32
    %166 = vector.broadcast %c3_i32 : i32 to vector<1x1x256xi32>
    %167 = arith.addi %57, %166 : vector<1x1x256xi32>
    %c0_i32_50 = arith.constant 0 : i32
    %168 = vector.broadcast %c0_i32_50 : i32 to vector<1x1x256xi32>
    %169 = arith.cmpi sge, %167, %168 : vector<1x1x256xi32>
    %c3_i32_51 = arith.constant 3 : i32
    %170 = vector.broadcast %c3_i32_51 : i32 to vector<1x1x256xi32>
    %171 = arith.addi %57, %170 : vector<1x1x256xi32>
    %c16_i32_52 = arith.constant 16 : i32
    %172 = vector.broadcast %c16_i32_52 : i32 to vector<1x1x256xi32>
    %173 = arith.cmpi slt, %171, %172 : vector<1x1x256xi32>
    %174 = arith.andi %169, %173 : vector<1x1x256xi1>
    %cst_53 = arith.constant 0.000000e+00 : f32
    %175 = vector.shape_cast %174 : vector<1x1x256xi1> to vector<1x1x256xi1>
    %176 = vector.broadcast %175 : vector<1x1x256xi1> to vector<1x2x256xi1>
    %177 = vector.broadcast %cst_53 : f32 to vector<1x2x256xf32>
    %178 = arith.select %176, %165, %177 : vector<1x2x256xi1>, vector<1x2x256xf32>
    %179 = vector.extract_strided_slice %178 {offsets = [0, 0, 0], sizes = [1, 1, 256], strides = [1, 1, 1]} : vector<1x2x256xf32> to vector<1x1x256xf32>
    %180 = vector.extract_strided_slice %178 {offsets = [0, 1, 0], sizes = [1, 1, 256], strides = [1, 1, 1]} : vector<1x2x256xf32> to vector<1x1x256xf32>
    %cst_54 = arith.constant 0.000000e+00 : f32
    %181 = vector.broadcast %cst_54 : f32 to vector<1x1x256xf32>
    %cst_55 = arith.constant 0.000000e+00 : f32
    %182 = vector.broadcast %cst_55 : f32 to vector<1x1x256xf32>
    %c0_56 = arith.constant 0 : index
    %183 = memref.load %arg4[%c0_56] : memref<98xf32, #tpu.memory_space<smem>>
    %c49 = arith.constant 49 : index
    %184 = memref.load %arg4[%c49] : memref<98xf32, #tpu.memory_space<smem>>
    %185 = vector.broadcast %183 : f32 to vector<1x1x256xf32>
    %186 = arith.mulf %185, %74 : vector<1x1x256xf32>
    %187 = arith.addf %182, %186 : vector<1x1x256xf32>
    %188 = vector.broadcast %184 : f32 to vector<1x1x256xf32>
    %189 = arith.mulf %188, %75 : vector<1x1x256xf32>
    %190 = arith.addf %187, %189 : vector<1x1x256xf32>
    %c1 = arith.constant 1 : index
    %191 = memref.load %arg4[%c1] : memref<98xf32, #tpu.memory_space<smem>>
    %c50 = arith.constant 50 : index
    %192 = memref.load %arg4[%c50] : memref<98xf32, #tpu.memory_space<smem>>
    %193 = vector.broadcast %191 : f32 to vector<1x1x256xf32>
    %194 = arith.mulf %193, %92 : vector<1x1x256xf32>
    %195 = arith.addf %190, %194 : vector<1x1x256xf32>
    %196 = vector.broadcast %192 : f32 to vector<1x1x256xf32>
    %197 = arith.mulf %196, %93 : vector<1x1x256xf32>
    %198 = arith.addf %195, %197 : vector<1x1x256xf32>
    %c2 = arith.constant 2 : index
    %199 = memref.load %arg4[%c2] : memref<98xf32, #tpu.memory_space<smem>>
    %c51 = arith.constant 51 : index
    %200 = memref.load %arg4[%c51] : memref<98xf32, #tpu.memory_space<smem>>
    %201 = vector.broadcast %199 : f32 to vector<1x1x256xf32>
    %202 = arith.mulf %201, %110 : vector<1x1x256xf32>
    %203 = arith.addf %198, %202 : vector<1x1x256xf32>
    %204 = vector.broadcast %200 : f32 to vector<1x1x256xf32>
    %205 = arith.mulf %204, %111 : vector<1x1x256xf32>
    %206 = arith.addf %203, %205 : vector<1x1x256xf32>
    %c3 = arith.constant 3 : index
    %207 = memref.load %arg4[%c3] : memref<98xf32, #tpu.memory_space<smem>>
    %c52 = arith.constant 52 : index
    %208 = memref.load %arg4[%c52] : memref<98xf32, #tpu.memory_space<smem>>
    %209 = vector.broadcast %207 : f32 to vector<1x1x256xf32>
    %210 = arith.mulf %209, %125 : vector<1x1x256xf32>
    %211 = arith.addf %206, %210 : vector<1x1x256xf32>
    %212 = vector.broadcast %208 : f32 to vector<1x1x256xf32>
    %213 = arith.mulf %212, %126 : vector<1x1x256xf32>
    %214 = arith.addf %211, %213 : vector<1x1x256xf32>
    %c4 = arith.constant 4 : index
    %215 = memref.load %arg4[%c4] : memref<98xf32, #tpu.memory_space<smem>>
    %c53 = arith.constant 53 : index
    %216 = memref.load %arg4[%c53] : memref<98xf32, #tpu.memory_space<smem>>
    %217 = vector.broadcast %215 : f32 to vector<1x1x256xf32>
    %218 = arith.mulf %217, %143 : vector<1x1x256xf32>
    %219 = arith.addf %214, %218 : vector<1x1x256xf32>
    %220 = vector.broadcast %216 : f32 to vector<1x1x256xf32>
    %221 = arith.mulf %220, %144 : vector<1x1x256xf32>
    %222 = arith.addf %219, %221 : vector<1x1x256xf32>
    %c5 = arith.constant 5 : index
    %223 = memref.load %arg4[%c5] : memref<98xf32, #tpu.memory_space<smem>>
    %c54 = arith.constant 54 : index
    %224 = memref.load %arg4[%c54] : memref<98xf32, #tpu.memory_space<smem>>
    %225 = vector.broadcast %223 : f32 to vector<1x1x256xf32>
    %226 = arith.mulf %225, %161 : vector<1x1x256xf32>
    %227 = arith.addf %222, %226 : vector<1x1x256xf32>
    %228 = vector.broadcast %224 : f32 to vector<1x1x256xf32>
    %229 = arith.mulf %228, %162 : vector<1x1x256xf32>
    %230 = arith.addf %227, %229 : vector<1x1x256xf32>
    %c6 = arith.constant 6 : index
    %231 = memref.load %arg4[%c6] : memref<98xf32, #tpu.memory_space<smem>>
    %c55 = arith.constant 55 : index
    %232 = memref.load %arg4[%c55] : memref<98xf32, #tpu.memory_space<smem>>
    %233 = vector.broadcast %231 : f32 to vector<1x1x256xf32>
    %234 = arith.mulf %233, %179 : vector<1x1x256xf32>
    %235 = arith.addf %230, %234 : vector<1x1x256xf32>
    %236 = vector.broadcast %232 : f32 to vector<1x1x256xf32>
    %237 = arith.mulf %236, %180 : vector<1x1x256xf32>
    %238 = arith.addf %235, %237 : vector<1x1x256xf32>
    %cst_57 = arith.constant 0.000000e+00 : f32
    %239 = vector.broadcast %cst_57 : f32 to vector<1x1x48xf32>
    %240 = vector.extract_strided_slice %238 {offsets = [0, 0, 0], sizes = [1, 1, 208], strides = [1, 1, 1]} : vector<1x1x256xf32> to vector<1x1x208xf32>
    %241 = tpu.concatenate %239, %240 in 2 : vector<1x1x48xf32>, vector<1x1x208xf32> -> vector<1x1x256xf32>
    %242 = arith.addf %181, %241 : vector<1x1x256xf32>
    %cst_58 = arith.constant 0.000000e+00 : f32
    %243 = vector.broadcast %cst_58 : f32 to vector<1x1x256xf32>
    %c7 = arith.constant 7 : index
    %244 = memref.load %arg4[%c7] : memref<98xf32, #tpu.memory_space<smem>>
    %c56 = arith.constant 56 : index
    %245 = memref.load %arg4[%c56] : memref<98xf32, #tpu.memory_space<smem>>
    %246 = vector.broadcast %244 : f32 to vector<1x1x256xf32>
    %247 = arith.mulf %246, %74 : vector<1x1x256xf32>
    %248 = arith.addf %243, %247 : vector<1x1x256xf32>
    %249 = vector.broadcast %245 : f32 to vector<1x1x256xf32>
    %250 = arith.mulf %249, %75 : vector<1x1x256xf32>
    %251 = arith.addf %248, %250 : vector<1x1x256xf32>
    %c8 = arith.constant 8 : index
    %252 = memref.load %arg4[%c8] : memref<98xf32, #tpu.memory_space<smem>>
    %c57 = arith.constant 57 : index
    %253 = memref.load %arg4[%c57] : memref<98xf32, #tpu.memory_space<smem>>
    %254 = vector.broadcast %252 : f32 to vector<1x1x256xf32>
    %255 = arith.mulf %254, %92 : vector<1x1x256xf32>
    %256 = arith.addf %251, %255 : vector<1x1x256xf32>
    %257 = vector.broadcast %253 : f32 to vector<1x1x256xf32>
    %258 = arith.mulf %257, %93 : vector<1x1x256xf32>
    %259 = arith.addf %256, %258 : vector<1x1x256xf32>
    %c9 = arith.constant 9 : index
    %260 = memref.load %arg4[%c9] : memref<98xf32, #tpu.memory_space<smem>>
    %c58 = arith.constant 58 : index
    %261 = memref.load %arg4[%c58] : memref<98xf32, #tpu.memory_space<smem>>
    %262 = vector.broadcast %260 : f32 to vector<1x1x256xf32>
    %263 = arith.mulf %262, %110 : vector<1x1x256xf32>
    %264 = arith.addf %259, %263 : vector<1x1x256xf32>
    %265 = vector.broadcast %261 : f32 to vector<1x1x256xf32>
    %266 = arith.mulf %265, %111 : vector<1x1x256xf32>
    %267 = arith.addf %264, %266 : vector<1x1x256xf32>
    %c10 = arith.constant 10 : index
    %268 = memref.load %arg4[%c10] : memref<98xf32, #tpu.memory_space<smem>>
    %c59 = arith.constant 59 : index
    %269 = memref.load %arg4[%c59] : memref<98xf32, #tpu.memory_space<smem>>
    %270 = vector.broadcast %268 : f32 to vector<1x1x256xf32>
    %271 = arith.mulf %270, %125 : vector<1x1x256xf32>
    %272 = arith.addf %267, %271 : vector<1x1x256xf32>
    %273 = vector.broadcast %269 : f32 to vector<1x1x256xf32>
    %274 = arith.mulf %273, %126 : vector<1x1x256xf32>
    %275 = arith.addf %272, %274 : vector<1x1x256xf32>
    %c11 = arith.constant 11 : index
    %276 = memref.load %arg4[%c11] : memref<98xf32, #tpu.memory_space<smem>>
    %c60 = arith.constant 60 : index
    %277 = memref.load %arg4[%c60] : memref<98xf32, #tpu.memory_space<smem>>
    %278 = vector.broadcast %276 : f32 to vector<1x1x256xf32>
    %279 = arith.mulf %278, %143 : vector<1x1x256xf32>
    %280 = arith.addf %275, %279 : vector<1x1x256xf32>
    %281 = vector.broadcast %277 : f32 to vector<1x1x256xf32>
    %282 = arith.mulf %281, %144 : vector<1x1x256xf32>
    %283 = arith.addf %280, %282 : vector<1x1x256xf32>
    %c12 = arith.constant 12 : index
    %284 = memref.load %arg4[%c12] : memref<98xf32, #tpu.memory_space<smem>>
    %c61 = arith.constant 61 : index
    %285 = memref.load %arg4[%c61] : memref<98xf32, #tpu.memory_space<smem>>
    %286 = vector.broadcast %284 : f32 to vector<1x1x256xf32>
    %287 = arith.mulf %286, %161 : vector<1x1x256xf32>
    %288 = arith.addf %283, %287 : vector<1x1x256xf32>
    %289 = vector.broadcast %285 : f32 to vector<1x1x256xf32>
    %290 = arith.mulf %289, %162 : vector<1x1x256xf32>
    %291 = arith.addf %288, %290 : vector<1x1x256xf32>
    %c13 = arith.constant 13 : index
    %292 = memref.load %arg4[%c13] : memref<98xf32, #tpu.memory_space<smem>>
    %c62 = arith.constant 62 : index
    %293 = memref.load %arg4[%c62] : memref<98xf32, #tpu.memory_space<smem>>
    %294 = vector.broadcast %292 : f32 to vector<1x1x256xf32>
    %295 = arith.mulf %294, %179 : vector<1x1x256xf32>
    %296 = arith.addf %291, %295 : vector<1x1x256xf32>
    %297 = vector.broadcast %293 : f32 to vector<1x1x256xf32>
    %298 = arith.mulf %297, %180 : vector<1x1x256xf32>
    %299 = arith.addf %296, %298 : vector<1x1x256xf32>
    %cst_59 = arith.constant 0.000000e+00 : f32
    %300 = vector.broadcast %cst_59 : f32 to vector<1x1x32xf32>
    %301 = vector.extract_strided_slice %299 {offsets = [0, 0, 0], sizes = [1, 1, 224], strides = [1, 1, 1]} : vector<1x1x256xf32> to vector<1x1x224xf32>
    %302 = tpu.concatenate %300, %301 in 2 : vector<1x1x32xf32>, vector<1x1x224xf32> -> vector<1x1x256xf32>
    %303 = arith.addf %242, %302 : vector<1x1x256xf32>
    %cst_60 = arith.constant 0.000000e+00 : f32
    %304 = vector.broadcast %cst_60 : f32 to vector<1x1x256xf32>
    %c14 = arith.constant 14 : index
    %305 = memref.load %arg4[%c14] : memref<98xf32, #tpu.memory_space<smem>>
    %c63 = arith.constant 63 : index
    %306 = memref.load %arg4[%c63] : memref<98xf32, #tpu.memory_space<smem>>
    %307 = vector.broadcast %305 : f32 to vector<1x1x256xf32>
    %308 = arith.mulf %307, %74 : vector<1x1x256xf32>
    %309 = arith.addf %304, %308 : vector<1x1x256xf32>
    %310 = vector.broadcast %306 : f32 to vector<1x1x256xf32>
    %311 = arith.mulf %310, %75 : vector<1x1x256xf32>
    %312 = arith.addf %309, %311 : vector<1x1x256xf32>
    %c15 = arith.constant 15 : index
    %313 = memref.load %arg4[%c15] : memref<98xf32, #tpu.memory_space<smem>>
    %c64 = arith.constant 64 : index
    %314 = memref.load %arg4[%c64] : memref<98xf32, #tpu.memory_space<smem>>
    %315 = vector.broadcast %313 : f32 to vector<1x1x256xf32>
    %316 = arith.mulf %315, %92 : vector<1x1x256xf32>
    %317 = arith.addf %312, %316 : vector<1x1x256xf32>
    %318 = vector.broadcast %314 : f32 to vector<1x1x256xf32>
    %319 = arith.mulf %318, %93 : vector<1x1x256xf32>
    %320 = arith.addf %317, %319 : vector<1x1x256xf32>
    %c16 = arith.constant 16 : index
    %321 = memref.load %arg4[%c16] : memref<98xf32, #tpu.memory_space<smem>>
    %c65 = arith.constant 65 : index
    %322 = memref.load %arg4[%c65] : memref<98xf32, #tpu.memory_space<smem>>
    %323 = vector.broadcast %321 : f32 to vector<1x1x256xf32>
    %324 = arith.mulf %323, %110 : vector<1x1x256xf32>
    %325 = arith.addf %320, %324 : vector<1x1x256xf32>
    %326 = vector.broadcast %322 : f32 to vector<1x1x256xf32>
    %327 = arith.mulf %326, %111 : vector<1x1x256xf32>
    %328 = arith.addf %325, %327 : vector<1x1x256xf32>
    %c17 = arith.constant 17 : index
    %329 = memref.load %arg4[%c17] : memref<98xf32, #tpu.memory_space<smem>>
    %c66 = arith.constant 66 : index
    %330 = memref.load %arg4[%c66] : memref<98xf32, #tpu.memory_space<smem>>
    %331 = vector.broadcast %329 : f32 to vector<1x1x256xf32>
    %332 = arith.mulf %331, %125 : vector<1x1x256xf32>
    %333 = arith.addf %328, %332 : vector<1x1x256xf32>
    %334 = vector.broadcast %330 : f32 to vector<1x1x256xf32>
    %335 = arith.mulf %334, %126 : vector<1x1x256xf32>
    %336 = arith.addf %333, %335 : vector<1x1x256xf32>
    %c18 = arith.constant 18 : index
    %337 = memref.load %arg4[%c18] : memref<98xf32, #tpu.memory_space<smem>>
    %c67 = arith.constant 67 : index
    %338 = memref.load %arg4[%c67] : memref<98xf32, #tpu.memory_space<smem>>
    %339 = vector.broadcast %337 : f32 to vector<1x1x256xf32>
    %340 = arith.mulf %339, %143 : vector<1x1x256xf32>
    %341 = arith.addf %336, %340 : vector<1x1x256xf32>
    %342 = vector.broadcast %338 : f32 to vector<1x1x256xf32>
    %343 = arith.mulf %342, %144 : vector<1x1x256xf32>
    %344 = arith.addf %341, %343 : vector<1x1x256xf32>
    %c19 = arith.constant 19 : index
    %345 = memref.load %arg4[%c19] : memref<98xf32, #tpu.memory_space<smem>>
    %c68 = arith.constant 68 : index
    %346 = memref.load %arg4[%c68] : memref<98xf32, #tpu.memory_space<smem>>
    %347 = vector.broadcast %345 : f32 to vector<1x1x256xf32>
    %348 = arith.mulf %347, %161 : vector<1x1x256xf32>
    %349 = arith.addf %344, %348 : vector<1x1x256xf32>
    %350 = vector.broadcast %346 : f32 to vector<1x1x256xf32>
    %351 = arith.mulf %350, %162 : vector<1x1x256xf32>
    %352 = arith.addf %349, %351 : vector<1x1x256xf32>
    %c20 = arith.constant 20 : index
    %353 = memref.load %arg4[%c20] : memref<98xf32, #tpu.memory_space<smem>>
    %c69 = arith.constant 69 : index
    %354 = memref.load %arg4[%c69] : memref<98xf32, #tpu.memory_space<smem>>
    %355 = vector.broadcast %353 : f32 to vector<1x1x256xf32>
    %356 = arith.mulf %355, %179 : vector<1x1x256xf32>
    %357 = arith.addf %352, %356 : vector<1x1x256xf32>
    %358 = vector.broadcast %354 : f32 to vector<1x1x256xf32>
    %359 = arith.mulf %358, %180 : vector<1x1x256xf32>
    %360 = arith.addf %357, %359 : vector<1x1x256xf32>
    %cst_61 = arith.constant 0.000000e+00 : f32
    %361 = vector.broadcast %cst_61 : f32 to vector<1x1x16xf32>
    %362 = vector.extract_strided_slice %360 {offsets = [0, 0, 0], sizes = [1, 1, 240], strides = [1, 1, 1]} : vector<1x1x256xf32> to vector<1x1x240xf32>
    %363 = tpu.concatenate %361, %362 in 2 : vector<1x1x16xf32>, vector<1x1x240xf32> -> vector<1x1x256xf32>
    %364 = arith.addf %303, %363 : vector<1x1x256xf32>
    %cst_62 = arith.constant 0.000000e+00 : f32
    %365 = vector.broadcast %cst_62 : f32 to vector<1x1x256xf32>
    %c21 = arith.constant 21 : index
    %366 = memref.load %arg4[%c21] : memref<98xf32, #tpu.memory_space<smem>>
    %c70 = arith.constant 70 : index
    %367 = memref.load %arg4[%c70] : memref<98xf32, #tpu.memory_space<smem>>
    %368 = vector.broadcast %366 : f32 to vector<1x1x256xf32>
    %369 = arith.mulf %368, %74 : vector<1x1x256xf32>
    %370 = arith.addf %365, %369 : vector<1x1x256xf32>
    %371 = vector.broadcast %367 : f32 to vector<1x1x256xf32>
    %372 = arith.mulf %371, %75 : vector<1x1x256xf32>
    %373 = arith.addf %370, %372 : vector<1x1x256xf32>
    %c22 = arith.constant 22 : index
    %374 = memref.load %arg4[%c22] : memref<98xf32, #tpu.memory_space<smem>>
    %c71 = arith.constant 71 : index
    %375 = memref.load %arg4[%c71] : memref<98xf32, #tpu.memory_space<smem>>
    %376 = vector.broadcast %374 : f32 to vector<1x1x256xf32>
    %377 = arith.mulf %376, %92 : vector<1x1x256xf32>
    %378 = arith.addf %373, %377 : vector<1x1x256xf32>
    %379 = vector.broadcast %375 : f32 to vector<1x1x256xf32>
    %380 = arith.mulf %379, %93 : vector<1x1x256xf32>
    %381 = arith.addf %378, %380 : vector<1x1x256xf32>
    %c23 = arith.constant 23 : index
    %382 = memref.load %arg4[%c23] : memref<98xf32, #tpu.memory_space<smem>>
    %c72 = arith.constant 72 : index
    %383 = memref.load %arg4[%c72] : memref<98xf32, #tpu.memory_space<smem>>
    %384 = vector.broadcast %382 : f32 to vector<1x1x256xf32>
    %385 = arith.mulf %384, %110 : vector<1x1x256xf32>
    %386 = arith.addf %381, %385 : vector<1x1x256xf32>
    %387 = vector.broadcast %383 : f32 to vector<1x1x256xf32>
    %388 = arith.mulf %387, %111 : vector<1x1x256xf32>
    %389 = arith.addf %386, %388 : vector<1x1x256xf32>
    %c24 = arith.constant 24 : index
    %390 = memref.load %arg4[%c24] : memref<98xf32, #tpu.memory_space<smem>>
    %c73 = arith.constant 73 : index
    %391 = memref.load %arg4[%c73] : memref<98xf32, #tpu.memory_space<smem>>
    %392 = vector.broadcast %390 : f32 to vector<1x1x256xf32>
    %393 = arith.mulf %392, %125 : vector<1x1x256xf32>
    %394 = arith.addf %389, %393 : vector<1x1x256xf32>
    %395 = vector.broadcast %391 : f32 to vector<1x1x256xf32>
    %396 = arith.mulf %395, %126 : vector<1x1x256xf32>
    %397 = arith.addf %394, %396 : vector<1x1x256xf32>
    %c25 = arith.constant 25 : index
    %398 = memref.load %arg4[%c25] : memref<98xf32, #tpu.memory_space<smem>>
    %c74 = arith.constant 74 : index
    %399 = memref.load %arg4[%c74] : memref<98xf32, #tpu.memory_space<smem>>
    %400 = vector.broadcast %398 : f32 to vector<1x1x256xf32>
    %401 = arith.mulf %400, %143 : vector<1x1x256xf32>
    %402 = arith.addf %397, %401 : vector<1x1x256xf32>
    %403 = vector.broadcast %399 : f32 to vector<1x1x256xf32>
    %404 = arith.mulf %403, %144 : vector<1x1x256xf32>
    %405 = arith.addf %402, %404 : vector<1x1x256xf32>
    %c26 = arith.constant 26 : index
    %406 = memref.load %arg4[%c26] : memref<98xf32, #tpu.memory_space<smem>>
    %c75 = arith.constant 75 : index
    %407 = memref.load %arg4[%c75] : memref<98xf32, #tpu.memory_space<smem>>
    %408 = vector.broadcast %406 : f32 to vector<1x1x256xf32>
    %409 = arith.mulf %408, %161 : vector<1x1x256xf32>
    %410 = arith.addf %405, %409 : vector<1x1x256xf32>
    %411 = vector.broadcast %407 : f32 to vector<1x1x256xf32>
    %412 = arith.mulf %411, %162 : vector<1x1x256xf32>
    %413 = arith.addf %410, %412 : vector<1x1x256xf32>
    %c27 = arith.constant 27 : index
    %414 = memref.load %arg4[%c27] : memref<98xf32, #tpu.memory_space<smem>>
    %c76 = arith.constant 76 : index
    %415 = memref.load %arg4[%c76] : memref<98xf32, #tpu.memory_space<smem>>
    %416 = vector.broadcast %414 : f32 to vector<1x1x256xf32>
    %417 = arith.mulf %416, %179 : vector<1x1x256xf32>
    %418 = arith.addf %413, %417 : vector<1x1x256xf32>
    %419 = vector.broadcast %415 : f32 to vector<1x1x256xf32>
    %420 = arith.mulf %419, %180 : vector<1x1x256xf32>
    %421 = arith.addf %418, %420 : vector<1x1x256xf32>
    %422 = arith.addf %364, %421 : vector<1x1x256xf32>
    %cst_63 = arith.constant 0.000000e+00 : f32
    %423 = vector.broadcast %cst_63 : f32 to vector<1x1x256xf32>
    %c28 = arith.constant 28 : index
    %424 = memref.load %arg4[%c28] : memref<98xf32, #tpu.memory_space<smem>>
    %c77 = arith.constant 77 : index
    %425 = memref.load %arg4[%c77] : memref<98xf32, #tpu.memory_space<smem>>
    %426 = vector.broadcast %424 : f32 to vector<1x1x256xf32>
    %427 = arith.mulf %426, %74 : vector<1x1x256xf32>
    %428 = arith.addf %423, %427 : vector<1x1x256xf32>
    %429 = vector.broadcast %425 : f32 to vector<1x1x256xf32>
    %430 = arith.mulf %429, %75 : vector<1x1x256xf32>
    %431 = arith.addf %428, %430 : vector<1x1x256xf32>
    %c29 = arith.constant 29 : index
    %432 = memref.load %arg4[%c29] : memref<98xf32, #tpu.memory_space<smem>>
    %c78 = arith.constant 78 : index
    %433 = memref.load %arg4[%c78] : memref<98xf32, #tpu.memory_space<smem>>
    %434 = vector.broadcast %432 : f32 to vector<1x1x256xf32>
    %435 = arith.mulf %434, %92 : vector<1x1x256xf32>
    %436 = arith.addf %431, %435 : vector<1x1x256xf32>
    %437 = vector.broadcast %433 : f32 to vector<1x1x256xf32>
    %438 = arith.mulf %437, %93 : vector<1x1x256xf32>
    %439 = arith.addf %436, %438 : vector<1x1x256xf32>
    %c30 = arith.constant 30 : index
    %440 = memref.load %arg4[%c30] : memref<98xf32, #tpu.memory_space<smem>>
    %c79 = arith.constant 79 : index
    %441 = memref.load %arg4[%c79] : memref<98xf32, #tpu.memory_space<smem>>
    %442 = vector.broadcast %440 : f32 to vector<1x1x256xf32>
    %443 = arith.mulf %442, %110 : vector<1x1x256xf32>
    %444 = arith.addf %439, %443 : vector<1x1x256xf32>
    %445 = vector.broadcast %441 : f32 to vector<1x1x256xf32>
    %446 = arith.mulf %445, %111 : vector<1x1x256xf32>
    %447 = arith.addf %444, %446 : vector<1x1x256xf32>
    %c31 = arith.constant 31 : index
    %448 = memref.load %arg4[%c31] : memref<98xf32, #tpu.memory_space<smem>>
    %c80 = arith.constant 80 : index
    %449 = memref.load %arg4[%c80] : memref<98xf32, #tpu.memory_space<smem>>
    %450 = vector.broadcast %448 : f32 to vector<1x1x256xf32>
    %451 = arith.mulf %450, %125 : vector<1x1x256xf32>
    %452 = arith.addf %447, %451 : vector<1x1x256xf32>
    %453 = vector.broadcast %449 : f32 to vector<1x1x256xf32>
    %454 = arith.mulf %453, %126 : vector<1x1x256xf32>
    %455 = arith.addf %452, %454 : vector<1x1x256xf32>
    %c32 = arith.constant 32 : index
    %456 = memref.load %arg4[%c32] : memref<98xf32, #tpu.memory_space<smem>>
    %c81 = arith.constant 81 : index
    %457 = memref.load %arg4[%c81] : memref<98xf32, #tpu.memory_space<smem>>
    %458 = vector.broadcast %456 : f32 to vector<1x1x256xf32>
    %459 = arith.mulf %458, %143 : vector<1x1x256xf32>
    %460 = arith.addf %455, %459 : vector<1x1x256xf32>
    %461 = vector.broadcast %457 : f32 to vector<1x1x256xf32>
    %462 = arith.mulf %461, %144 : vector<1x1x256xf32>
    %463 = arith.addf %460, %462 : vector<1x1x256xf32>
    %c33 = arith.constant 33 : index
    %464 = memref.load %arg4[%c33] : memref<98xf32, #tpu.memory_space<smem>>
    %c82 = arith.constant 82 : index
    %465 = memref.load %arg4[%c82] : memref<98xf32, #tpu.memory_space<smem>>
    %466 = vector.broadcast %464 : f32 to vector<1x1x256xf32>
    %467 = arith.mulf %466, %161 : vector<1x1x256xf32>
    %468 = arith.addf %463, %467 : vector<1x1x256xf32>
    %469 = vector.broadcast %465 : f32 to vector<1x1x256xf32>
    %470 = arith.mulf %469, %162 : vector<1x1x256xf32>
    %471 = arith.addf %468, %470 : vector<1x1x256xf32>
    %c34 = arith.constant 34 : index
    %472 = memref.load %arg4[%c34] : memref<98xf32, #tpu.memory_space<smem>>
    %c83 = arith.constant 83 : index
    %473 = memref.load %arg4[%c83] : memref<98xf32, #tpu.memory_space<smem>>
    %474 = vector.broadcast %472 : f32 to vector<1x1x256xf32>
    %475 = arith.mulf %474, %179 : vector<1x1x256xf32>
    %476 = arith.addf %471, %475 : vector<1x1x256xf32>
    %477 = vector.broadcast %473 : f32 to vector<1x1x256xf32>
    %478 = arith.mulf %477, %180 : vector<1x1x256xf32>
    %479 = arith.addf %476, %478 : vector<1x1x256xf32>
    %cst_64 = arith.constant 0.000000e+00 : f32
    %480 = vector.broadcast %cst_64 : f32 to vector<1x1x16xf32>
    %481 = vector.extract_strided_slice %479 {offsets = [0, 0, 16], sizes = [1, 1, 240], strides = [1, 1, 1]} : vector<1x1x256xf32> to vector<1x1x240xf32>
    %482 = tpu.concatenate %481, %480 in 2 : vector<1x1x240xf32>, vector<1x1x16xf32> -> vector<1x1x256xf32>
    %483 = arith.addf %422, %482 : vector<1x1x256xf32>
    %cst_65 = arith.constant 0.000000e+00 : f32
    %484 = vector.broadcast %cst_65 : f32 to vector<1x1x256xf32>
    %c35 = arith.constant 35 : index
    %485 = memref.load %arg4[%c35] : memref<98xf32, #tpu.memory_space<smem>>
    %c84 = arith.constant 84 : index
    %486 = memref.load %arg4[%c84] : memref<98xf32, #tpu.memory_space<smem>>
    %487 = vector.broadcast %485 : f32 to vector<1x1x256xf32>
    %488 = arith.mulf %487, %74 : vector<1x1x256xf32>
    %489 = arith.addf %484, %488 : vector<1x1x256xf32>
    %490 = vector.broadcast %486 : f32 to vector<1x1x256xf32>
    %491 = arith.mulf %490, %75 : vector<1x1x256xf32>
    %492 = arith.addf %489, %491 : vector<1x1x256xf32>
    %c36 = arith.constant 36 : index
    %493 = memref.load %arg4[%c36] : memref<98xf32, #tpu.memory_space<smem>>
    %c85 = arith.constant 85 : index
    %494 = memref.load %arg4[%c85] : memref<98xf32, #tpu.memory_space<smem>>
    %495 = vector.broadcast %493 : f32 to vector<1x1x256xf32>
    %496 = arith.mulf %495, %92 : vector<1x1x256xf32>
    %497 = arith.addf %492, %496 : vector<1x1x256xf32>
    %498 = vector.broadcast %494 : f32 to vector<1x1x256xf32>
    %499 = arith.mulf %498, %93 : vector<1x1x256xf32>
    %500 = arith.addf %497, %499 : vector<1x1x256xf32>
    %c37 = arith.constant 37 : index
    %501 = memref.load %arg4[%c37] : memref<98xf32, #tpu.memory_space<smem>>
    %c86 = arith.constant 86 : index
    %502 = memref.load %arg4[%c86] : memref<98xf32, #tpu.memory_space<smem>>
    %503 = vector.broadcast %501 : f32 to vector<1x1x256xf32>
    %504 = arith.mulf %503, %110 : vector<1x1x256xf32>
    %505 = arith.addf %500, %504 : vector<1x1x256xf32>
    %506 = vector.broadcast %502 : f32 to vector<1x1x256xf32>
    %507 = arith.mulf %506, %111 : vector<1x1x256xf32>
    %508 = arith.addf %505, %507 : vector<1x1x256xf32>
    %c38 = arith.constant 38 : index
    %509 = memref.load %arg4[%c38] : memref<98xf32, #tpu.memory_space<smem>>
    %c87 = arith.constant 87 : index
    %510 = memref.load %arg4[%c87] : memref<98xf32, #tpu.memory_space<smem>>
    %511 = vector.broadcast %509 : f32 to vector<1x1x256xf32>
    %512 = arith.mulf %511, %125 : vector<1x1x256xf32>
    %513 = arith.addf %508, %512 : vector<1x1x256xf32>
    %514 = vector.broadcast %510 : f32 to vector<1x1x256xf32>
    %515 = arith.mulf %514, %126 : vector<1x1x256xf32>
    %516 = arith.addf %513, %515 : vector<1x1x256xf32>
    %c39 = arith.constant 39 : index
    %517 = memref.load %arg4[%c39] : memref<98xf32, #tpu.memory_space<smem>>
    %c88 = arith.constant 88 : index
    %518 = memref.load %arg4[%c88] : memref<98xf32, #tpu.memory_space<smem>>
    %519 = vector.broadcast %517 : f32 to vector<1x1x256xf32>
    %520 = arith.mulf %519, %143 : vector<1x1x256xf32>
    %521 = arith.addf %516, %520 : vector<1x1x256xf32>
    %522 = vector.broadcast %518 : f32 to vector<1x1x256xf32>
    %523 = arith.mulf %522, %144 : vector<1x1x256xf32>
    %524 = arith.addf %521, %523 : vector<1x1x256xf32>
    %c40 = arith.constant 40 : index
    %525 = memref.load %arg4[%c40] : memref<98xf32, #tpu.memory_space<smem>>
    %c89 = arith.constant 89 : index
    %526 = memref.load %arg4[%c89] : memref<98xf32, #tpu.memory_space<smem>>
    %527 = vector.broadcast %525 : f32 to vector<1x1x256xf32>
    %528 = arith.mulf %527, %161 : vector<1x1x256xf32>
    %529 = arith.addf %524, %528 : vector<1x1x256xf32>
    %530 = vector.broadcast %526 : f32 to vector<1x1x256xf32>
    %531 = arith.mulf %530, %162 : vector<1x1x256xf32>
    %532 = arith.addf %529, %531 : vector<1x1x256xf32>
    %c41 = arith.constant 41 : index
    %533 = memref.load %arg4[%c41] : memref<98xf32, #tpu.memory_space<smem>>
    %c90 = arith.constant 90 : index
    %534 = memref.load %arg4[%c90] : memref<98xf32, #tpu.memory_space<smem>>
    %535 = vector.broadcast %533 : f32 to vector<1x1x256xf32>
    %536 = arith.mulf %535, %179 : vector<1x1x256xf32>
    %537 = arith.addf %532, %536 : vector<1x1x256xf32>
    %538 = vector.broadcast %534 : f32 to vector<1x1x256xf32>
    %539 = arith.mulf %538, %180 : vector<1x1x256xf32>
    %540 = arith.addf %537, %539 : vector<1x1x256xf32>
    %cst_66 = arith.constant 0.000000e+00 : f32
    %541 = vector.broadcast %cst_66 : f32 to vector<1x1x32xf32>
    %542 = vector.extract_strided_slice %540 {offsets = [0, 0, 32], sizes = [1, 1, 224], strides = [1, 1, 1]} : vector<1x1x256xf32> to vector<1x1x224xf32>
    %543 = tpu.concatenate %542, %541 in 2 : vector<1x1x224xf32>, vector<1x1x32xf32> -> vector<1x1x256xf32>
    %544 = arith.addf %483, %543 : vector<1x1x256xf32>
    %cst_67 = arith.constant 0.000000e+00 : f32
    %545 = vector.broadcast %cst_67 : f32 to vector<1x1x256xf32>
    %c42 = arith.constant 42 : index
    %546 = memref.load %arg4[%c42] : memref<98xf32, #tpu.memory_space<smem>>
    %c91 = arith.constant 91 : index
    %547 = memref.load %arg4[%c91] : memref<98xf32, #tpu.memory_space<smem>>
    %548 = vector.broadcast %546 : f32 to vector<1x1x256xf32>
    %549 = arith.mulf %548, %74 : vector<1x1x256xf32>
    %550 = arith.addf %545, %549 : vector<1x1x256xf32>
    %551 = vector.broadcast %547 : f32 to vector<1x1x256xf32>
    %552 = arith.mulf %551, %75 : vector<1x1x256xf32>
    %553 = arith.addf %550, %552 : vector<1x1x256xf32>
    %c43 = arith.constant 43 : index
    %554 = memref.load %arg4[%c43] : memref<98xf32, #tpu.memory_space<smem>>
    %c92 = arith.constant 92 : index
    %555 = memref.load %arg4[%c92] : memref<98xf32, #tpu.memory_space<smem>>
    %556 = vector.broadcast %554 : f32 to vector<1x1x256xf32>
    %557 = arith.mulf %556, %92 : vector<1x1x256xf32>
    %558 = arith.addf %553, %557 : vector<1x1x256xf32>
    %559 = vector.broadcast %555 : f32 to vector<1x1x256xf32>
    %560 = arith.mulf %559, %93 : vector<1x1x256xf32>
    %561 = arith.addf %558, %560 : vector<1x1x256xf32>
    %c44 = arith.constant 44 : index
    %562 = memref.load %arg4[%c44] : memref<98xf32, #tpu.memory_space<smem>>
    %c93 = arith.constant 93 : index
    %563 = memref.load %arg4[%c93] : memref<98xf32, #tpu.memory_space<smem>>
    %564 = vector.broadcast %562 : f32 to vector<1x1x256xf32>
    %565 = arith.mulf %564, %110 : vector<1x1x256xf32>
    %566 = arith.addf %561, %565 : vector<1x1x256xf32>
    %567 = vector.broadcast %563 : f32 to vector<1x1x256xf32>
    %568 = arith.mulf %567, %111 : vector<1x1x256xf32>
    %569 = arith.addf %566, %568 : vector<1x1x256xf32>
    %c45 = arith.constant 45 : index
    %570 = memref.load %arg4[%c45] : memref<98xf32, #tpu.memory_space<smem>>
    %c94 = arith.constant 94 : index
    %571 = memref.load %arg4[%c94] : memref<98xf32, #tpu.memory_space<smem>>
    %572 = vector.broadcast %570 : f32 to vector<1x1x256xf32>
    %573 = arith.mulf %572, %125 : vector<1x1x256xf32>
    %574 = arith.addf %569, %573 : vector<1x1x256xf32>
    %575 = vector.broadcast %571 : f32 to vector<1x1x256xf32>
    %576 = arith.mulf %575, %126 : vector<1x1x256xf32>
    %577 = arith.addf %574, %576 : vector<1x1x256xf32>
    %c46 = arith.constant 46 : index
    %578 = memref.load %arg4[%c46] : memref<98xf32, #tpu.memory_space<smem>>
    %c95 = arith.constant 95 : index
    %579 = memref.load %arg4[%c95] : memref<98xf32, #tpu.memory_space<smem>>
    %580 = vector.broadcast %578 : f32 to vector<1x1x256xf32>
    %581 = arith.mulf %580, %143 : vector<1x1x256xf32>
    %582 = arith.addf %577, %581 : vector<1x1x256xf32>
    %583 = vector.broadcast %579 : f32 to vector<1x1x256xf32>
    %584 = arith.mulf %583, %144 : vector<1x1x256xf32>
    %585 = arith.addf %582, %584 : vector<1x1x256xf32>
    %c47 = arith.constant 47 : index
    %586 = memref.load %arg4[%c47] : memref<98xf32, #tpu.memory_space<smem>>
    %c96 = arith.constant 96 : index
    %587 = memref.load %arg4[%c96] : memref<98xf32, #tpu.memory_space<smem>>
    %588 = vector.broadcast %586 : f32 to vector<1x1x256xf32>
    %589 = arith.mulf %588, %161 : vector<1x1x256xf32>
    %590 = arith.addf %585, %589 : vector<1x1x256xf32>
    %591 = vector.broadcast %587 : f32 to vector<1x1x256xf32>
    %592 = arith.mulf %591, %162 : vector<1x1x256xf32>
    %593 = arith.addf %590, %592 : vector<1x1x256xf32>
    %c48 = arith.constant 48 : index
    %594 = memref.load %arg4[%c48] : memref<98xf32, #tpu.memory_space<smem>>
    %c97 = arith.constant 97 : index
    %595 = memref.load %arg4[%c97] : memref<98xf32, #tpu.memory_space<smem>>
    %596 = vector.broadcast %594 : f32 to vector<1x1x256xf32>
    %597 = arith.mulf %596, %179 : vector<1x1x256xf32>
    %598 = arith.addf %593, %597 : vector<1x1x256xf32>
    %599 = vector.broadcast %595 : f32 to vector<1x1x256xf32>
    %600 = arith.mulf %599, %180 : vector<1x1x256xf32>
    %601 = arith.addf %598, %600 : vector<1x1x256xf32>
    %cst_68 = arith.constant 0.000000e+00 : f32
    %602 = vector.broadcast %cst_68 : f32 to vector<1x1x48xf32>
    %603 = vector.extract_strided_slice %601 {offsets = [0, 0, 48], sizes = [1, 1, 208], strides = [1, 1, 1]} : vector<1x1x256xf32> to vector<1x1x208xf32>
    %604 = tpu.concatenate %603, %602 in 2 : vector<1x1x208xf32>, vector<1x1x48xf32> -> vector<1x1x256xf32>
    %605 = arith.addf %544, %604 : vector<1x1x256xf32>
    %606 = arith.negf %605 : vector<1x1x256xf32>
    %607 = math.exp %606 : vector<1x1x256xf32>
    %cst_69 = arith.constant 1.000000e+00 : f32
    %608 = vector.broadcast %cst_69 : f32 to vector<1x1x256xf32>
    %609 = arith.addf %608, %607 : vector<1x1x256xf32>
    %610 = arith.divf %608, %609 : vector<1x1x256xf32>
    %611 = vector.broadcast %610 : vector<1x1x256xf32> to vector<1x32x256xf32>
    %612 = arith.mulf %33, %611 : vector<1x32x256xf32>
    %c0_70 = arith.constant 0 : index
    %c0_71 = arith.constant 0 : index
    %c0_72 = arith.constant 0 : index
    %613 = vector.load %arg5[%c0_70, %c0_71, %c0_72] : memref<1x32x256xf32, #tpu.memory_space<vmem>>, vector<1x32x256xf32>
    tpu.vector_store %arg5[%c0_70, %c0_71, %c0_72], %612 {strides = array<i32>} : memref<1x32x256xf32, #tpu.memory_space<vmem>>, vector<1x32x256xf32>,
    return
  }
  func.func @transform_0(%arg0: i32) -> (i32, i32, i32) {
    %c0_i32 = arith.constant 0 : i32
    %c0_i32_0 = arith.constant 0 : i32
    %c0_i32_1 = arith.constant 0 : i32
    return %arg0, %c0_i32, %c0_i32_0 : i32, i32, i32
  }
  func.func @transform_1(%arg0: i32) -> (i32, i32) {
    %c0_i32 = arith.constant 0 : i32
    %c0_i32_0 = arith.constant 0 : i32
    %c0_i32_1 = arith.constant 0 : i32
    return %c0_i32, %c0_i32_0 : i32, i32
  }
  func.func @transform_2(%arg0: i32) -> (i32, i32) {
    %c0_i32 = arith.constant 0 : i32
    %c0_i32_0 = arith.constant 0 : i32
    %c0_i32_1 = arith.constant 0 : i32
    return %c0_i32, %c0_i32_0 : i32, i32
  }
  func.func @transform_3(%arg0: i32) -> i32 {
    %c0_i32 = arith.constant 0 : i32
    %c0_i32_0 = arith.constant 0 : i32
    return %c0_i32 : i32
  }
  func.func @transform_4(%arg0: i32) -> (i32, i32, i32) {
    %c0_i32 = arith.constant 0 : i32
    %c0_i32_0 = arith.constant 0 : i32
    %c0_i32_1 = arith.constant 0 : i32
    return %arg0, %c0_i32, %c0_i32_0 : i32, i32, i32
  }
}

</mosaic_0001>

<llo_original>
// kernel: tpu_custom_call.1
$region0: #{tpu_custom_call.1}
  #allocation0 [shape = 'u32[]', space=smem, size = 0x4, offset = 0x4, fixed_abs, tag = 'smem constant byte address 0x4 - core index']
  #allocation1 [shape = 'u32[144,128]{1,0:T(1,128)}', space=vmem, size = 0x12000, scoped, tag = 'internal scratch']
  %s0 = inlined_call_operand.hbm [shape: f32[2,32,256], index: 0, kind: input, shape index: {}]
  %s1 = inlined_call_operand.vmem [shape: f32[32,2], index: 1, kind: input, shape index: {}]
  %s2 = inlined_call_operand.vmem [shape: f32[32,2], index: 2, kind: input, shape index: {}]
  %s3 = inlined_call_operand.vmem [shape: f32[98], index: 3, kind: input, shape index: {}]
  %s4 = inlined_call_operand.hbm [shape: f32[2,32,256], index: 4, kind: output, shape index: {}]
  %s5 = sld [smem:[#allocation0]]
  $region57: #{tpu_custom_call.1} parent=0
    _
  %s7 = ssub.s32 1, %s5
  %s8 = scalar_select 0, %s7, %s5
  $region1: #{tpu_custom_call.1} parent=0
    #allocation2 [shape = 'u8[65536]{0}', space=vmem, size = 0x10000, scoped, tag = 'input window, operand 0']
    #allocation3 [shape = 's32[2]{0}', space=sflag, size = 0x8, scoped, tag = 'scoped memory for tpu_custom_call.1']
    #allocation4 [shape = 's32[2]{0}', space=sflag, size = 0x8, scoped, tag = 'scoped memory for tpu_custom_call.1']
    #allocation5 [shape = 's32[2]{0}', space=sflag, size = 0x8, scoped, tag = 'scoped memory for tpu_custom_call.1']
    #allocation6 [shape = 'u8[512]{0}', space=smem, size = 0x200, scoped, tag = 'input window, operand 3, single buffered']
    #allocation7 [shape = 'u8[65536]{0}', space=vmem, size = 0x10000, scoped, tag = 'output window, operand 0']
    %9 = vsyncpa [#allocation3], 0
    %s10 = scalar_lea.sflag [#allocation3], 1
    %11 = vsyncpa %s10, 0
    %12 = vsyncpa [#allocation5], 0
    %13 = vsyncpa [#allocation4], 0
    %s14 = scalar_lea.sflag [#allocation4], 1
    %15 = vsyncpa %s14, 0
    loop: start=0, step=1, limit=4
    $region2: #{tpu_custom_call.1} parent=1 // loop_pre_header
      _
    $region3: #{tpu_custom_call.1} parent=1 // loop_header
      %s17 = sphi 0, %s21
      %p18 = scmp.ge.s32.totalorder %s17, 4
      %s27 = sphi 0, %s29
      %s30 = sphi 0, %s27
      %s31 = sphi 0, %s30
      %s47 = sphi 0, %s31
      %s51 = sphi 0, %s51
      %s53 = sphi 0, %s51
      %s54 = sphi 0, %s53
      %s68 = sphi 0, %s54
      %s72 = sphi 0, %s72
      %s74 = sphi 0, %s72
      %s75 = sphi 0, %s74
      %s89 = sphi 0, %s75
      %s93 = sphi 0, %s93
      %s95 = sphi 0, %s93
      %s96 = sphi 0, %s95
      %s110 = sphi 0, %s96
      %s116 = sphi 0, %s118
      %s119 = sphi 0, %s116
      %s120 = sphi 0, %s119
      %s136 = sphi 0, %s120
    $region4: #{tpu_custom_call.1} parent=1 // loop_header_branch
      %20 = sbr.rel (%p18) target = $region8
    $region5: #{tpu_custom_call.1} parent=1 // loop_body
      %s22 = ssub.s32 %s17, 1
      %s23 = ssub.s32 %s17, 2
      %s24 = sadd.s32 %s17, 1
      %s25 = ssub.s32 %s17, %s24
      %p26 = scmp.eq.s32.totalorder %s25, 0
      %s28 = sadd.s32 %s27, 1
      %s29 = scalar_select %p26, %s27, %s28
      %p32 = pneg %p26
      %p33 = scmp.eq.s32.totalorder %s17, 1
      %p34 = por %p32, %p33
      %p35 = scmp.ne.s32.totalorder %s27, %s30
      %p36 = scmp.eq.s32.totalorder %s17, 0
      %p37 = por %p35, %p36
      %p38 = scmp.ne.s32.totalorder %s27, %s30
      %p39 = scmp.eq.s32.totalorder %s22, 1
      %p40 = por %p38, %p39
      %p41 = scmp.ne.s32.totalorder %s30, %s31
      %p42 = scmp.eq.s32.totalorder %s22, 0
      %p43 = por %p41, %p42
      %p44 = scmp.ne.s32.totalorder %s30, %s31
      %p45 = scmp.eq.s32.totalorder %s23, 1
      %p46 = por %p44, %p45
      %p48 = scmp.ne.s32.totalorder %s31, %s47
      %p49 = scmp.eq.s32.totalorder %s23, 0
      %p50 = por %p48, %p49
      %s52 = sadd.s32 %s51, 1
      %p55 = scmp.eq.s32.totalorder %s17, 1
      %p56 = scmp.ne.s32.totalorder %s51, %s53
      %p57 = scmp.eq.s32.totalorder %s17, 0
      %p58 = por %p56, %p57
      %p59 = scmp.ne.s32.totalorder %s51, %s53
      %p60 = scmp.eq.s32.totalorder %s22, 1
      %p61 = por %p59, %p60
      %p62 = scmp.ne.s32.totalorder %s53, %s54
      %p63 = scmp.eq.s32.totalorder %s22, 0
      %p64 = por %p62, %p63
      %p65 = scmp.ne.s32.totalorder %s53, %s54
      %p66 = scmp.eq.s32.totalorder %s23, 1
      %p67 = por %p65, %p66
      %p69 = scmp.ne.s32.totalorder %s54, %s68
      %p70 = scmp.eq.s32.totalorder %s23, 0
      %p71 = por %p69, %p70
      %s73 = sadd.s32 %s72, 1
      %p76 = scmp.eq.s32.totalorder %s17, 1
      %p77 = scmp.ne.s32.totalorder %s72, %s74
      %p78 = scmp.eq.s32.totalorder %s17, 0
      %p79 = por %p77, %p78
      %p80 = scmp.ne.s32.totalorder %s72, %s74
      %p81 = scmp.eq.s32.totalorder %s22, 1
      %p82 = por %p80, %p81
      %p83 = scmp.ne.s32.totalorder %s74, %s75
      %p84 = scmp.eq.s32.totalorder %s22, 0
      %p85 = por %p83, %p84
      %p86 = scmp.ne.s32.totalorder %s74, %s75
      %p87 = scmp.eq.s32.totalorder %s23, 1
      %p88 = por %p86, %p87
      %p90 = scmp.ne.s32.totalorder %s75, %s89
      %p91 = scmp.eq.s32.totalorder %s23, 0
      %p92 = por %p90, %p91
      %s94 = sadd.s32 %s93, 1
      %p97 = scmp.eq.s32.totalorder %s17, 1
      %p98 = scmp.ne.s32.totalorder %s93, %s95
      %p99 = scmp.eq.s32.totalorder %s17, 0
      %p100 = por %p98, %p99
      %p101 = scmp.ne.s32.totalorder %s93, %s95
      %p102 = scmp.eq.s32.totalorder %s22, 1
      %p103 = por %p101, %p102
      %p104 = scmp.ne.s32.totalorder %s95, %s96
      %p105 = scmp.eq.s32.totalorder %s22, 0
      %p106 = por %p104, %p105
      %p107 = scmp.ne.s32.totalorder %s95, %s96
      %p108 = scmp.eq.s32.totalorder %s23, 1
      %p109 = por %p107, %p108
      %p111 = scmp.ne.s32.totalorder %s96, %s110
      %p112 = scmp.eq.s32.totalorder %s23, 0
      %p113 = por %p111, %p112
      %s114 = ssub.s32 %s17, %s24
      %p115 = scmp.eq.s32.totalorder %s114, 0
      %s117 = sadd.s32 %s116, 1
      %s118 = scalar_select %p115, %s116, %s117
      %p121 = pneg %p115
      %p122 = scmp.eq.s32.totalorder %s17, 1
      %p123 = por %p121, %p122
      %p124 = scmp.ne.s32.totalorder %s116, %s119
      %p125 = scmp.eq.s32.totalorder %s17, 0
      %p126 = por %p124, %p125
      %p127 = scmp.ne.s32.totalorder %s116, %s119
      %p128 = scmp.eq.s32.totalorder %s22, 1
      %p129 = por %p127, %p128
      %p130 = scmp.ne.s32.totalorder %s119, %s120
      %p131 = scmp.eq.s32.totalorder %s22, 0
      %p132 = por %p130, %p131
      %p133 = scmp.ne.s32.totalorder %s119, %s120
      %p134 = scmp.eq.s32.totalorder %s23, 1
      %p135 = por %p133, %p134
      %p137 = scmp.ne.s32.totalorder %s120, %s136
      %p138 = scmp.eq.s32.totalorder %s23, 0
      %p139 = por %p137, %p138
      %p140 = scmp.le.s32.totalorder 1, %s17
      %p141 = scmp.lt.s32.totalorder %s17, 3
      %p142 = pnand %p140, %p141
      %p143 = pneg %p142
      // Predicated region
      $region9: #{tpu_custom_call.1} parent=5 // pred_check
        _
      $region10: #{tpu_custom_call.1} parent=5 // pred_check_branch
        %145 = sbr.rel (%p142) target = $region12
      $region11: #{tpu_custom_call.1} parent=5 // pred_region
        %s146 = ssub.s32 %s17, 1
        // Predicated region
        $region13: #{tpu_custom_call.1} parent=11 // pred_check
          %p147 = pneg %p64
        $region14: #{tpu_custom_call.1} parent=11 // pred_check_branch
          %149 = sbr.rel (%p147) target = $region16
        $region15: #{tpu_custom_call.1} parent=11 // pred_region
          _
        $region16: #{tpu_custom_call.1} parent=11 // pred_fallthru
          _
        // Predicated region
        $region17: #{tpu_custom_call.1} parent=11 // pred_check
          %p150 = pneg %p85
        $region18: #{tpu_custom_call.1} parent=11 // pred_check_branch
          %152 = sbr.rel (%p150) target = $region20
        $region19: #{tpu_custom_call.1} parent=11 // pred_region
          _
        $region20: #{tpu_custom_call.1} parent=11 // pred_fallthru
          _
        // Predicated region
        $region21: #{tpu_custom_call.1} parent=11 // pred_check
          %p153 = pneg %p106
        $region22: #{tpu_custom_call.1} parent=11 // pred_check_branch
          %155 = sbr.rel (%p153) target = $region24
        $region23: #{tpu_custom_call.1} parent=11 // pred_region
          %s157 = ssub.s32 16, 16
          %158 = vsyncadd [#allocation5], %s157
          %s160 = sshll.u32 %s3, 4
          %s161 = int_to_ptr.vmem [resolvable:$true] %s160
          %163 = dma.vmem_to_smem %s161, 16, [#allocation6], [#allocation5]
        $region24: #{tpu_custom_call.1} parent=11 // pred_fallthru
          _
      $region12: #{tpu_custom_call.1} parent=5 // pred_fallthru
        _
      %p164 = scmp.lt.s32.totalorder %s17, 2
      // Predicated region
      $region25: #{tpu_custom_call.1} parent=5 // pred_check
        %p165 = pneg %p164
      $region26: #{tpu_custom_call.1} parent=5 // pred_check_branch
        %167 = sbr.rel (%p165) target = $region28
      $region27: #{tpu_custom_call.1} parent=5 // pred_region
        // Predicated region
        $region29: #{tpu_custom_call.1} parent=27 // pred_check
          %p168 = pneg %p37
        $region30: #{tpu_custom_call.1} parent=27 // pred_check_branch
          %170 = sbr.rel (%p168) target = $region32
        $region31: #{tpu_custom_call.1} parent=27 // pred_region
          %s171 = sand.u32 %s27, 1
          %s172 = scalar_lea.sflag [#allocation3], %s171
          %s173 = sand.u32 %s27, 1
          %s174 = smul.addr %s173, 64
          %s175 = scalar_lea.vmem [#allocation2], %s174
          %s177 = ssub.s32 1024, 1024
          %178 = vsyncadd %s172, %s177
          %s179 = smul.addr %s17, 8
          %s180 = smul.addr %s179, 128
          %s181 = scalar_lea.hbm %s0, %s180
          %s182 = sshll.u32 %s175, 4
          %s183 = int_to_ptr.vmem [resolvable:$true] %s182
          %188 = dma.hbm_to_vmem [thread:$0]  %s181, 1024, %s183, %s172, 256, 256, 16
        $region32: #{tpu_custom_call.1} parent=27 // pred_fallthru
          _
      $region28: #{tpu_custom_call.1} parent=5 // pred_fallthru
        _
      %p189 = scmp.le.s32.totalorder 1, %s17
      %p190 = scmp.lt.s32.totalorder %s17, 3
      %p191 = pnand %p189, %p190
      %p192 = pneg %p191
      // Predicated region
      $region33: #{tpu_custom_call.1} parent=5 // pred_check
        _
      $region34: #{tpu_custom_call.1} parent=5 // pred_check_branch
        %194 = sbr.rel (%p191) target = $region36
      $region35: #{tpu_custom_call.1} parent=5 // pred_region
        %s195 = ssub.s32 %s17, 1
        %s196 = sand.u32 %s30, 1
        %s197 = scalar_lea.sflag [#allocation3], %s196
        %s198 = sand.u32 %s30, 1
        %s199 = smul.addr %s198, 64
        %s200 = scalar_lea.vmem [#allocation2], %s199
        // Predicated region
        $region37: #{tpu_custom_call.1} parent=35 // pred_check
          %p201 = pneg %p43
        $region38: #{tpu_custom_call.1} parent=35 // pred_check_branch
          %203 = sbr.rel (%p201) target = $region40
        $region39: #{tpu_custom_call.1} parent=35 // pred_region
          %204 = dma.done %s197, 1024
        $region40: #{tpu_custom_call.1} parent=35 // pred_fallthru
          _
        // Predicated region
        $region41: #{tpu_custom_call.1} parent=35 // pred_check
          %p205 = pneg %p106
        $region42: #{tpu_custom_call.1} parent=35 // pred_check_branch
          %207 = sbr.rel (%p205) target = $region44
        $region43: #{tpu_custom_call.1} parent=35 // pred_region
          %208 = dma.done [#allocation5], 16
        $region44: #{tpu_custom_call.1} parent=35 // pred_fallthru
          _
        %209 = sfence
        %s210 = sand.u32 %s30, 1
        %s211 = scalar_lea.sflag [#allocation3], %s210
        %s212 = sand.u32 %s30, 1
        %s213 = smul.addr %s212, 64
        %s214 = scalar_lea.vmem [#allocation2], %s213
        %p215 = pneg %p43
        %p216 = pneg %p40
        %p217 = pneg %p64
        %p218 = pneg %p61
        %p219 = pneg %p85
        %p220 = pneg %p82
        %p221 = pneg %p106
        %p222 = pneg %p103
        %p223 = pneg %p132
        %p224 = pneg %p129
        %s225 = sand.u32 %s119, 1
        %s226 = scalar_lea.sflag [#allocation4], %s225
        %s227 = sand.u32 %s119, 1
        %s228 = smul.addr %s227, 64
        %s229 = scalar_lea.vmem [#allocation7], %s228
        %v230 = vld [vmem:[%s200] sm:$0xff]
        %v231 = vld [vmem:[%s200 + $0x8] sm:$0xff]
        %v232 = vld [vmem:[%s200 + $0x10] sm:$0xff]
        %v233 = vld [vmem:[%s200 + $0x18] sm:$0xff]
        %v234 = vld [vmem:[%s200 + $0x20] sm:$0xff]
        %v235 = vld [vmem:[%s200 + $0x28] sm:$0xff]
        %v236 = vld [vmem:[%s200 + $0x30] sm:$0xff]
        %v237 = vld [vmem:[%s200 + $0x38] sm:$0xff]
        %v238 = vadd.f32 %v230, %v231
        %239 = vadd.xlane.f32.xlu0 %v238
        %v240 = vpop.xlane.xlu0 %239
        %v241 = vadd.f32 %v232, %v233
        %242 = vadd.xlane.f32.xlu0 %v241
        %v243 = vpop.xlane.xlu0 %242
        %v244 = vadd.f32 %v234, %v235
        %245 = vadd.xlane.f32.xlu0 %v244
        %v246 = vpop.xlane.xlu0 %245
        %v247 = vadd.f32 %v236, %v237
        %248 = vadd.xlane.f32.xlu0 %v247
        %v249 = vpop.xlane.xlu0 %248
        %v250 = vmul.f32 %v240, 0.00390625
        %v251 = vmul.f32 %v243, 0.00390625
        %v252 = vmul.f32 %v246, 0.00390625
        %v253 = vmul.f32 %v249, 0.00390625
        %v254 = vmax.f32 %v230, %v231
        %255 = vmax.xlane.f32.xlu0 %v254
        %v256 = vpop.xlane.xlu0 %255
        %v257 = vmax.f32 %v232, %v233
        %258 = vmax.xlane.f32.xlu0 %v257
        %v259 = vpop.xlane.xlu0 %258
        %v260 = vmax.f32 %v234, %v235
        %261 = vmax.xlane.f32.xlu0 %v260
        %v262 = vpop.xlane.xlu0 %261
        %v263 = vmax.f32 %v236, %v237
        %264 = vmax.xlane.f32.xlu0 %v263
        %v265 = vpop.xlane.xlu0 %264
        %v266 = vld [vmem:[%s1] sm:$0xff]
        %v267 = vld [vmem:[%s1 + $0x8] sm:$0xff]
        %v268 = vld [vmem:[%s1 + $0x10] sm:$0xff]
        %v269 = vld [vmem:[%s1 + $0x18] sm:$0xff]
        %v270 = vld [vmem:[%s2] sm:$0xff]
        %v271 = vld [vmem:[%s2 + $0x8] sm:$0xff]
        %v272 = vld [vmem:[%s2 + $0x10] sm:$0xff]
        %v273 = vld [vmem:[%s2 + $0x18] sm:$0xff]
        %275 = vset.pattern.permute.xlu0 0
        %276 = vperm.xlu0 %275, %v250
        %v277 = vpop.permute.xlu0 %276
        %280 = vset.pattern.permute.xlu0 0
        %281 = vperm.xlu0 %280, %v251
        %v282 = vpop.permute.xlu0 %281
        %285 = vset.pattern.permute.xlu0 0
        %286 = vperm.xlu0 %285, %v252
        %v287 = vpop.permute.xlu0 %286
        %290 = vset.pattern.permute.xlu0 0
        %291 = vperm.xlu0 %290, %v253
        %v292 = vpop.permute.xlu0 %291
        %295 = vset.pattern.permute.xlu0 0
        %296 = vperm.xlu0 %295, %v256
        %v297 = vpop.permute.xlu0 %296
        %300 = vset.pattern.permute.xlu0 0
        %301 = vperm.xlu0 %300, %v259
        %v302 = vpop.permute.xlu0 %301
        %305 = vset.pattern.permute.xlu0 0
        %306 = vperm.xlu0 %305, %v262
        %v307 = vpop.permute.xlu0 %306
        %310 = vset.pattern.permute.xlu0 0
        %311 = vperm.xlu0 %310, %v265
        %v312 = vpop.permute.xlu0 %311
        %v314 = vmul.f32 %v277, %v266
        %v315 = vmul.f32 %v282, %v267
        %v316 = vmul.f32 %v287, %v268
        %v317 = vmul.f32 %v292, %v269
        %v318 = vmul.f32 %v297, %v266
        %v319 = vmul.f32 %v302, %v267
        %v320 = vmul.f32 %v307, %v268
        %v321 = vmul.f32 %v312, %v269
        %vm322 = vcmask 15360
        %v323 = vsel %vm322, %v314, 0.0
        %v324 = vsel %vm322, %v315, 0.0
        %v325 = vadd.f32 %v323, %v324
        %v326 = vsel %vm322, %v316, 0.0
        %v327 = vadd.f32 %v325, %v326
        %v328 = vsel %vm322, %v317, 0.0
        %v329 = vadd.f32 %v327, %v328
        %v330 = vrot.slane %v329, 4
        %v331 = vadd.f32 %v329, %v330
        %v332 = vrot.slane %v331, 2
        %v333 = vadd.f32 %v331, %v332
        %v334 = vrot.slane %v333, 1
        %v335 = vadd.f32 %v333, %v334
        %v336 = vsel %vm322, %v318, 0.0
        %v337 = vsel %vm322, %v319, 0.0
        %v338 = vadd.f32 %v336, %v337
        %v339 = vsel %vm322, %v320, 0.0
        %v340 = vadd.f32 %v338, %v339
        %v341 = vsel %vm322, %v321, 0.0
        %v342 = vadd.f32 %v340, %v341
        %v343 = vrot.slane %v342, 4
        %v344 = vadd.f32 %v342, %v343
        %v345 = vrot.slane %v344, 2
        %v346 = vadd.f32 %v344, %v345
        %v347 = vrot.slane %v346, 1
        %v348 = vadd.f32 %v346, %v347
        %v349 = vmax.f32 %v335, 0.0
        %v350 = vmax.f32 %v348, 0.0
        %v351 = vmul.f32 %v349, %v270
        %v352 = vmul.f32 %v349, %v271
        %v353 = vmul.f32 %v349, %v272
        %v354 = vmul.f32 %v349, %v273
        %v355 = vmul.f32 %v350, %v270
        %v356 = vmul.f32 %v350, %v271
        %v357 = vmul.f32 %v350, %v272
        %v358 = vmul.f32 %v350, %v273
        %v359 = vsel %vm322, %v351, 0.0
        %360 = vadd.xlane.f32.xlu0 %v359
        %v361 = vpop.xlane.xlu0 %360
        %v362 = vsel %vm322, %v352, 0.0
        %363 = vadd.xlane.f32.xlu0 %v362
        %v364 = vpop.xlane.xlu0 %363
        %v365 = vsel %vm322, %v353, 0.0
        %366 = vadd.xlane.f32.xlu0 %v365
        %v367 = vpop.xlane.xlu0 %366
        %v368 = vsel %vm322, %v354, 0.0
        %369 = vadd.xlane.f32.xlu0 %v368
        %v370 = vpop.xlane.xlu0 %369
        %v371 = vsel %vm322, %v355, 0.0
        %372 = vadd.xlane.f32.xlu0 %v371
        %v373 = vpop.xlane.xlu0 %372
        %v374 = vsel %vm322, %v356, 0.0
        %375 = vadd.xlane.f32.xlu0 %v374
        %v376 = vpop.xlane.xlu0 %375
        %v377 = vsel %vm322, %v357, 0.0
        %378 = vadd.xlane.f32.xlu0 %v377
        %v379 = vpop.xlane.xlu0 %378
        %v380 = vsel %vm322, %v358, 0.0
        %381 = vadd.xlane.f32.xlu0 %v380
        %v382 = vpop.xlane.xlu0 %381
        %v383 = vadd.f32 %v361, %v373
        %v384 = vadd.f32 %v364, %v376
        %v385 = vadd.f32 %v367, %v379
        %v386 = vadd.f32 %v370, %v382
        %v387 = vxor.u32 %v383, 2147483648
        %v388 = vxor.u32 %v384, 2147483648
        %v389 = vxor.u32 %v385, 2147483648
        %v390 = vxor.u32 %v386, 2147483648
        %v391 = vmul.f32 %v387, 1.442695
        %v392 = vpow.pop %v391
        %v393 = vmul.f32 %v388, 1.442695
        %v394 = vpow.pop %v393
        %v395 = vmul.f32 %v389, 1.442695
        %v396 = vpow.pop %v395
        %v397 = vmul.f32 %v390, 1.442695
        %v398 = vpow.pop %v397
        %v399 = vadd.f32 %v392, 1.0
        %v400 = vadd.f32 %v394, 1.0
        %v401 = vadd.f32 %v396, 1.0
        %v402 = vadd.f32 %v398, 1.0
        %v403 = vrcp.pop %v399
        %v404 = vmul.f32 1.0, %v403
        %v405 = vrcp.pop %v400
        %v406 = vmul.f32 1.0, %v405
        %v407 = vrcp.pop %v401
        %v408 = vmul.f32 1.0, %v407
        %v409 = vrcp.pop %v402
        %v410 = vmul.f32 1.0, %v409
        %v411 = vmul.f32 %v230, %v404
        %v412 = vmul.f32 %v231, %v404
        %v413 = vmul.f32 %v232, %v406
        %v414 = vmul.f32 %v233, %v406
        %v415 = vmul.f32 %v234, %v408
        %v416 = vmul.f32 %v235, %v408
        %v417 = vmul.f32 %v236, %v410
        %v418 = vmul.f32 %v237, %v410
        %v419 = vadd.f32 %v411, %v413
        %v420 = vadd.f32 %v419, %v415
        %v421 = vadd.f32 %v420, %v417
        %v422 = vrot.slane %v421, 4
        %v423 = vadd.f32 %v421, %v422
        %v424 = vrot.slane %v423, 2
        %v425 = vadd.f32 %v423, %v424
        %v426 = vrot.slane %v425, 1
        %v427 = vadd.f32 %v425, %v426
        %v428 = vadd.f32 %v412, %v414
        %v429 = vadd.f32 %v428, %v416
        %v430 = vadd.f32 %v429, %v418
        %v431 = vrot.slane %v430, 4
        %v432 = vadd.f32 %v430, %v431
        %v433 = vrot.slane %v432, 2
        %v434 = vadd.f32 %v432, %v433
        %v435 = vrot.slane %v434, 1
        %v436 = vadd.f32 %v434, %v435
        %v437 = vmul.f32 %v427, 0.03125
        %v438 = vmul.f32 %v436, 0.03125
        %v439 = vmax.f32 %v411, %v415
        %v440 = vmax.f32 %v413, %v417
        %v441 = vmax.f32 %v439, %v440
        %v442 = vrot.slane %v441, 4
        %v443 = vmax.f32 %v441, %v442
        %v444 = vrot.slane %v443, 2
        %v445 = vmax.f32 %v443, %v444
        %v446 = vrot.slane %v445, 1
        %v447 = vmax.f32 %v445, %v446
        %v448 = vmax.f32 %v412, %v416
        %v449 = vmax.f32 %v414, %v418
        %v450 = vmax.f32 %v448, %v449
        %v451 = vrot.slane %v450, 4
        %v452 = vmax.f32 %v450, %v451
        %v453 = vrot.slane %v452, 2
        %v454 = vmax.f32 %v452, %v453
        %v455 = vrot.slane %v454, 1
        %v456 = vmax.f32 %v454, %v455
        %vm457 = vcmask 1040384
        %v458 = vsel %vm457, %v437, %v447
        %v459 = vsel %vm457, %v438, %v456
        %v460 = vlaneseq
        %v461 = vand.u32 %v460, 127
        %v462 = vadd.s32 %v461, 128
        %vm463 = vcmp.lt.s32.totalorder %v461, 0
        %v464 = vsub.s32 0, %v461
        %v465 = vsel %vm463, %v464, %v461
        %v466 = vshrl.u32 %v465, 4
        %v467 = vand.u32 %v465, 15
        %v468 = vsub.s32 0, %v467
        %v469 = vsel %vm463, %v468, %v467
        %vm470 = vcmp.lt.s32.totalorder %v462, 0
        %v471 = vsub.s32 0, %v462
        %v472 = vsel %vm470, %v471, %v462
        %v473 = vshrl.u32 %v472, 4
        %v474 = vand.u32 %v472, 15
        %v475 = vsub.s32 0, %v474
        %v476 = vsel %vm470, %v475, %v474
        %vm477 = vcmp.ne.s32.totalorder %v469, 0
        %vm478 = vcmp.ne.s32.totalorder %v476, 0
        %vm479 = vcmp.lt.s32.totalorder %v469, 0
        %vm480 = vcmp.lt.s32.totalorder %v476, 0
        %vm481 = vmand %vm479, %vm477
        %vm482 = vmand %vm480, %vm478
        %v483 = vadd.s32 %v469, 16
        %v484 = vadd.s32 %v476, 16
        %v485 = vsel %vm481, %v483, %v469
        %v486 = vsel %vm482, %v484, %v476
        %489 = vrot.lane.b32.xlu0 %v458, 3
        %v490 = vpop.permute.xlu0 %489
        %491 = vrot.lane.b32.xlu0 %v459, 3
        %v492 = vpop.permute.xlu0 %491
        %vm493 = vcmask 23552
        %v494 = vsel %vm493, %v490, %v492
        %v497 = vsel %vm493, 0.0, %v490
        %v498 = vadd.s32 %v485, 4294967293
        %v499 = vadd.s32 %v486, 4294967293
        %vm500 = vcmp.ge.s32.totalorder %v498, 0
        %vm501 = vcmp.ge.s32.totalorder %v499, 0
        %vm502 = vcmp.lt.s32.totalorder %v498, 16
        %vm503 = vcmp.lt.s32.totalorder %v499, 16
        %vm504 = vmand %vm500, %vm502
        %vm505 = vmand %vm501, %vm503
        %v506 = vsel %vm504, 1, 0
        %v507 = vsel %vm505, 1, 0
        %vm508 = vcmp.eq.s32.totalorder %v506, 1
        %vm509 = vcmp.eq.s32.totalorder %v507, 1
        %v510 = vsel %vm508, %v497, 0.0
        %v511 = vsel %vm509, %v494, 0.0
        %512 = vrot.lane.b32.xlu0 %v458, 2
        %v513 = vpop.permute.xlu0 %512
        %514 = vrot.lane.b32.xlu0 %v459, 2
        %v515 = vpop.permute.xlu0 %514
        %v516 = vsel %vm322, %v513, %v515
        %v519 = vsel %vm322, 0.0, %v513
        %v520 = vadd.s32 %v485, 4294967294
        %v521 = vadd.s32 %v486, 4294967294
        %vm522 = vcmp.ge.s32.totalorder %v520, 0
        %vm523 = vcmp.ge.s32.totalorder %v521, 0
        %vm524 = vcmp.lt.s32.totalorder %v520, 16
        %vm525 = vcmp.lt.s32.totalorder %v521, 16
        %vm526 = vmand %vm522, %vm524
        %vm527 = vmand %vm523, %vm525
        %v528 = vsel %vm526, 1, 0
        %v529 = vsel %vm527, 1, 0
        %vm530 = vcmp.eq.s32.totalorder %v528, 1
        %vm531 = vcmp.eq.s32.totalorder %v529, 1
        %v532 = vsel %vm530, %v519, 0.0
        %v533 = vsel %vm531, %v516, 0.0
        %534 = vrot.lane.b32.xlu0 %v458, 1
        %v535 = vpop.permute.xlu0 %534
        %536 = vrot.lane.b32.xlu0 %v459, 1
        %v537 = vpop.permute.xlu0 %536
        %vm538 = vcmask 7168
        %v539 = vsel %vm538, %v535, %v537
        %v542 = vsel %vm538, 0.0, %v535
        %v543 = vadd.s32 %v485, 4294967295
        %v544 = vadd.s32 %v486, 4294967295
        %vm545 = vcmp.ge.s32.totalorder %v543, 0
        %vm546 = vcmp.ge.s32.totalorder %v544, 0
        %vm547 = vcmp.lt.s32.totalorder %v543, 16
        %vm548 = vcmp.lt.s32.totalorder %v544, 16
        %vm549 = vmand %vm545, %vm547
        %vm550 = vmand %vm546, %vm548
        %v551 = vsel %vm549, 1, 0
        %v552 = vsel %vm550, 1, 0
        %vm553 = vcmp.eq.s32.totalorder %v551, 1
        %vm554 = vcmp.eq.s32.totalorder %v552, 1
        %v555 = vsel %vm553, %v542, 0.0
        %v556 = vsel %vm554, %v539, 0.0
        %vm557 = vcmp.ge.s32.totalorder %v485, 0
        %vm558 = vcmp.ge.s32.totalorder %v486, 0
        %vm559 = vcmp.lt.s32.totalorder %v485, 16
        %vm560 = vcmp.lt.s32.totalorder %v486, 16
        %vm561 = vmand %vm557, %vm559
        %vm562 = vmand %vm558, %vm560
        %v563 = vsel %vm561, 1, 0
        %v564 = vsel %vm562, 1, 0
        %vm565 = vcmp.eq.s32.totalorder %v563, 1
        %vm566 = vcmp.eq.s32.totalorder %v564, 1
        %v567 = vsel %vm565, %v458, 0.0
        %v568 = vsel %vm566, %v459, 0.0
        %569 = vrot.lane.b32.xlu0 %v458, 127
        %v570 = vpop.permute.xlu0 %569
        %571 = vrot.lane.b32.xlu0 %v459, 127
        %v572 = vpop.permute.xlu0 %571
        %vm573 = vcmask 1039360
        %v574 = vsel %vm573, %v570, %v572
        %v577 = vsel %vm573, %v572, 0.0
        %v578 = vadd.s32 %v485, 1
        %v579 = vadd.s32 %v486, 1
        %vm580 = vcmp.ge.s32.totalorder %v578, 0
        %vm581 = vcmp.ge.s32.totalorder %v579, 0
        %vm582 = vcmp.lt.s32.totalorder %v578, 16
        %vm583 = vcmp.lt.s32.totalorder %v579, 16
        %vm584 = vmand %vm580, %vm582
        %vm585 = vmand %vm581, %vm583
        %v586 = vsel %vm584, 1, 0
        %v587 = vsel %vm585, 1, 0
        %vm588 = vcmp.eq.s32.totalorder %v586, 1
        %vm589 = vcmp.eq.s32.totalorder %v587, 1
        %v590 = vsel %vm588, %v574, 0.0
        %v591 = vsel %vm589, %v577, 0.0
        %592 = vrot.lane.b32.xlu0 %v458, 126
        %v593 = vpop.permute.xlu0 %592
        %594 = vrot.lane.b32.xlu0 %v459, 126
        %v595 = vpop.permute.xlu0 %594
        %vm596 = vcmask 1031168
        %v597 = vsel %vm596, %v593, %v595
        %v600 = vsel %vm596, %v595, 0.0
        %v601 = vadd.s32 %v485, 2
        %v602 = vadd.s32 %v486, 2
        %vm603 = vcmp.ge.s32.totalorder %v601, 0
        %vm604 = vcmp.ge.s32.totalorder %v602, 0
        %vm605 = vcmp.lt.s32.totalorder %v601, 16
        %vm606 = vcmp.lt.s32.totalorder %v602, 16
        %vm607 = vmand %vm603, %vm605
        %vm608 = vmand %vm604, %vm606
        %v609 = vsel %vm607, 1, 0
        %v610 = vsel %vm608, 1, 0
        %vm611 = vcmp.eq.s32.totalorder %v609, 1
        %vm612 = vcmp.eq.s32.totalorder %v610, 1
        %v613 = vsel %vm611, %v597, 0.0
        %v614 = vsel %vm612, %v600, 0.0
        %615 = vrot.lane.b32.xlu0 %v458, 125
        %v616 = vpop.permute.xlu0 %615
        %617 = vrot.lane.b32.xlu0 %v459, 125
        %v618 = vpop.permute.xlu0 %617
        %vm619 = vcmask 1022976
        %v620 = vsel %vm619, %v616, %v618
        %v623 = vsel %vm619, %v618, 0.0
        %v624 = vadd.s32 %v485, 3
        %v625 = vadd.s32 %v486, 3
        %vm626 = vcmp.ge.s32.totalorder %v624, 0
        %vm627 = vcmp.ge.s32.totalorder %v625, 0
        %vm628 = vcmp.lt.s32.totalorder %v624, 16
        %vm629 = vcmp.lt.s32.totalorder %v625, 16
        %vm630 = vmand %vm626, %vm628
        %vm631 = vmand %vm627, %vm629
        %v632 = vsel %vm630, 1, 0
        %v633 = vsel %vm631, 1, 0
        %vm634 = vcmp.eq.s32.totalorder %v632, 1
        %vm635 = vcmp.eq.s32.totalorder %v633, 1
        %v636 = vsel %vm634, %v620, 0.0
        %v637 = vsel %vm635, %v623, 0.0
        %s638 = sld [smem:[#allocation6]]
        %s639 = sld [smem:[#allocation6 + $0x31]]
        %v640 = vstv %s638
        %v641 = vmul.f32 %v640, %v510
        %v642 = vmul.f32 %v640, %v511
        %v643 = vadd.f32 %v641, 0.0
        %v644 = vadd.f32 %v642, 0.0
        %v645 = vstv %s639
        %v646 = vmul.f32 %v645, %v510
        %v647 = vmul.f32 %v645, %v511
        %v650 = vrot.slane %v646, 1
        %v651 = vrot.slane %v647, 1
        %v654 = vadd.f32 %v643, %v650
        %v655 = vadd.f32 %v644, %v651
        %s656 = sld [smem:[#allocation6 + $0x1]]
        %s657 = sld [smem:[#allocation6 + $0x32]]
        %v658 = vstv %s656
        %v659 = vmul.f32 %v658, %v532
        %v660 = vmul.f32 %v658, %v533
        %v661 = vadd.f32 %v654, %v659
        %v662 = vadd.f32 %v655, %v660
        %v663 = vstv %s657
        %v664 = vmul.f32 %v663, %v532
        %v665 = vmul.f32 %v663, %v533
        %v668 = vrot.slane %v664, 1
        %v669 = vrot.slane %v665, 1
        %v672 = vadd.f32 %v661, %v668
        %v673 = vadd.f32 %v662, %v669
        %s674 = sld [smem:[#allocation6 + $0x2]]
        %s675 = sld [smem:[#allocation6 + $0x33]]
        %v676 = vstv %s674
        %v677 = vmul.f32 %v676, %v555
        %v678 = vmul.f32 %v676, %v556
        %v679 = vadd.f32 %v672, %v677
        %v680 = vadd.f32 %v673, %v678
        %v681 = vstv %s675
        %v682 = vmul.f32 %v681, %v555
        %v683 = vmul.f32 %v681, %v556
        %v686 = vrot.slane %v682, 1
        %v687 = vrot.slane %v683, 1
        %v690 = vadd.f32 %v679, %v686
        %v691 = vadd.f32 %v680, %v687
        %s692 = sld [smem:[#allocation6 + $0x3]]
        %s693 = sld [smem:[#allocation6 + $0x34]]
        %v694 = vstv %s692
        %v695 = vmul.f32 %v694, %v567
        %v696 = vmul.f32 %v694, %v568
        %v697 = vadd.f32 %v690, %v695
        %v698 = vadd.f32 %v691, %v696
        %v699 = vstv %s693
        %v700 = vmul.f32 %v699, %v567
        %v701 = vmul.f32 %v699, %v568
        %v704 = vrot.slane %v700, 1
        %v705 = vrot.slane %v701, 1
        %v708 = vadd.f32 %v697, %v704
        %v709 = vadd.f32 %v698, %v705
        %s710 = sld [smem:[#allocation6 + $0x4]]
        %s711 = sld [smem:[#allocation6 + $0x35]]
        %v712 = vstv %s710
        %v713 = vmul.f32 %v712, %v590
        %v714 = vmul.f32 %v712, %v591
        %v715 = vadd.f32 %v708, %v713
        %v716 = vadd.f32 %v709, %v714
        %v717 = vstv %s711
        %v718 = vmul.f32 %v717, %v590
        %v719 = vmul.f32 %v717, %v591
        %v722 = vrot.slane %v718, 1
        %v723 = vrot.slane %v719, 1
        %v726 = vadd.f32 %v715, %v722
        %v727 = vadd.f32 %v716, %v723
        %s728 = sld [smem:[#allocation6 + $0x5]]
        %s729 = sld [smem:[#allocation6 + $0x36]]
        %v730 = vstv %s728
        %v731 = vmul.f32 %v730, %v613
        %v732 = vmul.f32 %v730, %v614
        %v733 = vadd.f32 %v726, %v731
        %v734 = vadd.f32 %v727, %v732
        %v735 = vstv %s729
        %v736 = vmul.f32 %v735, %v613
        %v737 = vmul.f32 %v735, %v614
        %v740 = vrot.slane %v736, 1
        %v741 = vrot.slane %v737, 1
        %v744 = vadd.f32 %v733, %v740
        %v745 = vadd.f32 %v734, %v741
        %s746 = sld [smem:[#allocation6 + $0x6]]
        %s747 = sld [smem:[#allocation6 + $0x37]]
        %v748 = vstv %s746
        %v749 = vmul.f32 %v748, %v636
        %v750 = vmul.f32 %v748, %v637
        %v751 = vadd.f32 %v744, %v749
        %v752 = vadd.f32 %v745, %v750
        %v753 = vstv %s747
        %v754 = vmul.f32 %v753, %v636
        %v755 = vmul.f32 %v753, %v637
        %v758 = vrot.slane %v754, 1
        %v759 = vrot.slane %v755, 1
        %v762 = vadd.f32 %v751, %v758
        %v763 = vadd.f32 %v752, %v759
        %766 = vrot.lane.b32.xlu0 %v762, 48
        %v767 = vpop.permute.xlu0 %766
        %768 = vrot.lane.b32.xlu0 %v763, 48
        %v769 = vpop.permute.xlu0 %768
        %vm770 = vcmask 392192
        %v771 = vsel %vm770, %v767, %v769
        %v774 = vsel %vm770, 0.0, %v767
        %v775 = vadd.f32 %v774, 0.0
        %v776 = vadd.f32 %v771, 0.0
        %s777 = sld [smem:[#allocation6 + $0x7]]
        %s778 = sld [smem:[#allocation6 + $0x38]]
        %v779 = vstv %s777
        %v780 = vmul.f32 %v779, %v510
        %v781 = vmul.f32 %v779, %v511
        %v782 = vadd.f32 %v780, 0.0
        %v783 = vadd.f32 %v781, 0.0
        %v784 = vstv %s778
        %v785 = vmul.f32 %v784, %v510
        %v786 = vmul.f32 %v784, %v511
        %v789 = vrot.slane %v785, 1
        %v790 = vrot.slane %v786, 1
        %v793 = vadd.f32 %v782, %v789
        %v794 = vadd.f32 %v783, %v790
        %s795 = sld [smem:[#allocation6 + $0x8]]
        %s796 = sld [smem:[#allocation6 + $0x39]]
        %v797 = vstv %s795
        %v798 = vmul.f32 %v797, %v532
        %v799 = vmul.f32 %v797, %v533
        %v800 = vadd.f32 %v793, %v798
        %v801 = vadd.f32 %v794, %v799
        %v802 = vstv %s796
        %v803 = vmul.f32 %v802, %v532
        %v804 = vmul.f32 %v802, %v533
        %v807 = vrot.slane %v803, 1
        %v808 = vrot.slane %v804, 1
        %v811 = vadd.f32 %v800, %v807
        %v812 = vadd.f32 %v801, %v808
        %s813 = sld [smem:[#allocation6 + $0x9]]
        %s814 = sld [smem:[#allocation6 + $0x3a]]
        %v815 = vstv %s813
        %v816 = vmul.f32 %v815, %v555
        %v817 = vmul.f32 %v815, %v556
        %v818 = vadd.f32 %v811, %v816
        %v819 = vadd.f32 %v812, %v817
        %v820 = vstv %s814
        %v821 = vmul.f32 %v820, %v555
        %v822 = vmul.f32 %v820, %v556
        %v825 = vrot.slane %v821, 1
        %v826 = vrot.slane %v822, 1
        %v829 = vadd.f32 %v818, %v825
        %v830 = vadd.f32 %v819, %v826
        %s831 = sld [smem:[#allocation6 + $0xa]]
        %s832 = sld [smem:[#allocation6 + $0x3b]]
        %v833 = vstv %s831
        %v834 = vmul.f32 %v833, %v567
        %v835 = vmul.f32 %v833, %v568
        %v836 = vadd.f32 %v829, %v834
        %v837 = vadd.f32 %v830, %v835
        %v838 = vstv %s832
        %v839 = vmul.f32 %v838, %v567
        %v840 = vmul.f32 %v838, %v568
        %v843 = vrot.slane %v839, 1
        %v844 = vrot.slane %v840, 1
        %v847 = vadd.f32 %v836, %v843
        %v848 = vadd.f32 %v837, %v844
        %s849 = sld [smem:[#allocation6 + $0xb]]
        %s850 = sld [smem:[#allocation6 + $0x3c]]
        %v851 = vstv %s849
        %v852 = vmul.f32 %v851, %v590
        %v853 = vmul.f32 %v851, %v591
        %v854 = vadd.f32 %v847, %v852
        %v855 = vadd.f32 %v848, %v853
        %v856 = vstv %s850
        %v857 = vmul.f32 %v856, %v590
        %v858 = vmul.f32 %v856, %v591
        %v861 = vrot.slane %v857, 1
        %v862 = vrot.slane %v858, 1
        %v865 = vadd.f32 %v854, %v861
        %v866 = vadd.f32 %v855, %v862
        %s867 = sld [smem:[#allocation6 + $0xc]]
        %s868 = sld [smem:[#allocation6 + $0x3d]]
        %v869 = vstv %s867
        %v870 = vmul.f32 %v869, %v613
        %v871 = vmul.f32 %v869, %v614
        %v872 = vadd.f32 %v865, %v870
        %v873 = vadd.f32 %v866, %v871
        %v874 = vstv %s868
        %v875 = vmul.f32 %v874, %v613
        %v876 = vmul.f32 %v874, %v614
        %v879 = vrot.slane %v875, 1
        %v880 = vrot.slane %v876, 1
        %v883 = vadd.f32 %v872, %v879
        %v884 = vadd.f32 %v873, %v880
        %s885 = sld [smem:[#allocation6 + $0xd]]
        %s886 = sld [smem:[#allocation6 + $0x3e]]
        %v887 = vstv %s885
        %v888 = vmul.f32 %v887, %v636
        %v889 = vmul.f32 %v887, %v637
        %v890 = vadd.f32 %v883, %v888
        %v891 = vadd.f32 %v884, %v889
        %v892 = vstv %s886
        %v893 = vmul.f32 %v892, %v636
        %v894 = vmul.f32 %v892, %v637
        %v897 = vrot.slane %v893, 1
        %v898 = vrot.slane %v894, 1
        %v901 = vadd.f32 %v890, %v897
        %v902 = vadd.f32 %v891, %v898
        %905 = vrot.lane.b32.xlu0 %v901, 32
        %v906 = vpop.permute.xlu0 %905
        %907 = vrot.lane.b32.xlu0 %v902, 32
        %v908 = vpop.permute.xlu0 %907
        %vm909 = vcmask 261120
        %v910 = vsel %vm909, %v906, %v908
        %v913 = vsel %vm909, 0.0, %v906
        %v914 = vadd.f32 %v775, %v913
        %v915 = vadd.f32 %v776, %v910
        %s916 = sld [smem:[#allocation6 + $0xe]]
        %s917 = sld [smem:[#allocation6 + $0x3f]]
        %v918 = vstv %s916
        %v919 = vmul.f32 %v918, %v510
        %v920 = vmul.f32 %v918, %v511
        %v921 = vadd.f32 %v919, 0.0
        %v922 = vadd.f32 %v920, 0.0
        %v923 = vstv %s917
        %v924 = vmul.f32 %v923, %v510
        %v925 = vmul.f32 %v923, %v511
        %v928 = vrot.slane %v924, 1
        %v929 = vrot.slane %v925, 1
        %v932 = vadd.f32 %v921, %v928
        %v933 = vadd.f32 %v922, %v929
        %s934 = sld [smem:[#allocation6 + $0xf]]
        %s935 = sld [smem:[#allocation6 + $0x40]]
        %v936 = vstv %s934
        %v937 = vmul.f32 %v936, %v532
        %v938 = vmul.f32 %v936, %v533
        %v939 = vadd.f32 %v932, %v937
        %v940 = vadd.f32 %v933, %v938
        %v941 = vstv %s935
        %v942 = vmul.f32 %v941, %v532
        %v943 = vmul.f32 %v941, %v533
        %v946 = vrot.slane %v942, 1
        %v947 = vrot.slane %v943, 1
        %v950 = vadd.f32 %v939, %v946
        %v951 = vadd.f32 %v940, %v947
        %s952 = sld [smem:[#allocation6 + $0x10]]
        %s953 = sld [smem:[#allocation6 + $0x41]]
        %v954 = vstv %s952
        %v955 = vmul.f32 %v954, %v555
        %v956 = vmul.f32 %v954, %v556
        %v957 = vadd.f32 %v950, %v955
        %v958 = vadd.f32 %v951, %v956
        %v959 = vstv %s953
        %v960 = vmul.f32 %v959, %v555
        %v961 = vmul.f32 %v959, %v556
        %v964 = vrot.slane %v960, 1
        %v965 = vrot.slane %v961, 1
        %v968 = vadd.f32 %v957, %v964
        %v969 = vadd.f32 %v958, %v965
        %s970 = sld [smem:[#allocation6 + $0x11]]
        %s971 = sld [smem:[#allocation6 + $0x42]]
        %v972 = vstv %s970
        %v973 = vmul.f32 %v972, %v567
        %v974 = vmul.f32 %v972, %v568
        %v975 = vadd.f32 %v968, %v973
        %v976 = vadd.f32 %v969, %v974
        %v977 = vstv %s971
        %v978 = vmul.f32 %v977, %v567
        %v979 = vmul.f32 %v977, %v568
        %v982 = vrot.slane %v978, 1
        %v983 = vrot.slane %v979, 1
        %v986 = vadd.f32 %v975, %v982
        %v987 = vadd.f32 %v976, %v983
        %s988 = sld [smem:[#allocation6 + $0x12]]
        %s989 = sld [smem:[#allocation6 + $0x43]]
        %v990 = vstv %s988
        %v991 = vmul.f32 %v990, %v590
        %v992 = vmul.f32 %v990, %v591
        %v993 = vadd.f32 %v986, %v991
        %v994 = vadd.f32 %v987, %v992
        %v995 = vstv %s989
        %v996 = vmul.f32 %v995, %v590
        %v997 = vmul.f32 %v995, %v591
        %v1000 = vrot.slane %v996, 1
        %v1001 = vrot.slane %v997, 1
        %v1004 = vadd.f32 %v993, %v1000
        %v1005 = vadd.f32 %v994, %v1001
        %s1006 = sld [smem:[#allocation6 + $0x13]]
        %s1007 = sld [smem:[#allocation6 + $0x44]]
        %v1008 = vstv %s1006
        %v1009 = vmul.f32 %v1008, %v613
        %v1010 = vmul.f32 %v1008, %v614
        %v1011 = vadd.f32 %v1004, %v1009
        %v1012 = vadd.f32 %v1005, %v1010
        %v1013 = vstv %s1007
        %v1014 = vmul.f32 %v1013, %v613
        %v1015 = vmul.f32 %v1013, %v614
        %v1018 = vrot.slane %v1014, 1
        %v1019 = vrot.slane %v1015, 1
        %v1022 = vadd.f32 %v1011, %v1018
        %v1023 = vadd.f32 %v1012, %v1019
        %s1024 = sld [smem:[#allocation6 + $0x14]]
        %s1025 = sld [smem:[#allocation6 + $0x45]]
        %v1026 = vstv %s1024
        %v1027 = vmul.f32 %v1026, %v636
        %v1028 = vmul.f32 %v1026, %v637
        %v1029 = vadd.f32 %v1022, %v1027
        %v1030 = vadd.f32 %v1023, %v1028
        %v1031 = vstv %s1025
        %v1032 = vmul.f32 %v1031, %v636
        %v1033 = vmul.f32 %v1031, %v637
        %v1036 = vrot.slane %v1032, 1
        %v1037 = vrot.slane %v1033, 1
        %v1040 = vadd.f32 %v1029, %v1036
        %v1041 = vadd.f32 %v1030, %v1037
        %1044 = vrot.lane.b32.xlu0 %v1040, 16
        %v1045 = vpop.permute.xlu0 %1044
        %1046 = vrot.lane.b32.xlu0 %v1041, 16
        %v1047 = vpop.permute.xlu0 %1046
        %vm1048 = vcmask 130048
        %v1049 = vsel %vm1048, %v1045, %v1047
        %v1052 = vsel %vm1048, 0.0, %v1045
        %v1053 = vadd.f32 %v914, %v1052
        %v1054 = vadd.f32 %v915, %v1049
        %s1055 = sld [smem:[#allocation6 + $0x15]]
        %s1056 = sld [smem:[#allocation6 + $0x46]]
        %v1057 = vstv %s1055
        %v1058 = vmul.f32 %v1057, %v510
        %v1059 = vmul.f32 %v1057, %v511
        %v1060 = vadd.f32 %v1058, 0.0
        %v1061 = vadd.f32 %v1059, 0.0
        %v1062 = vstv %s1056
        %v1063 = vmul.f32 %v1062, %v510
        %v1064 = vmul.f32 %v1062, %v511
        %v1067 = vrot.slane %v1063, 1
        %v1068 = vrot.slane %v1064, 1
        %v1071 = vadd.f32 %v1060, %v1067
        %v1072 = vadd.f32 %v1061, %v1068
        %s1073 = sld [smem:[#allocation6 + $0x16]]
        %s1074 = sld [smem:[#allocation6 + $0x47]]
        %v1075 = vstv %s1073
        %v1076 = vmul.f32 %v1075, %v532
        %v1077 = vmul.f32 %v1075, %v533
        %v1078 = vadd.f32 %v1071, %v1076
        %v1079 = vadd.f32 %v1072, %v1077
        %v1080 = vstv %s1074
        %v1081 = vmul.f32 %v1080, %v532
        %v1082 = vmul.f32 %v1080, %v533
        %v1085 = vrot.slane %v1081, 1
        %v1086 = vrot.slane %v1082, 1
        %v1089 = vadd.f32 %v1078, %v1085
        %v1090 = vadd.f32 %v1079, %v1086
        %s1091 = sld [smem:[#allocation6 + $0x17]]
        %s1092 = sld [smem:[#allocation6 + $0x48]]
        %v1093 = vstv %s1091
        %v1094 = vmul.f32 %v1093, %v555
        %v1095 = vmul.f32 %v1093, %v556
        %v1096 = vadd.f32 %v1089, %v1094
        %v1097 = vadd.f32 %v1090, %v1095
        %v1098 = vstv %s1092
        %v1099 = vmul.f32 %v1098, %v555
        %v1100 = vmul.f32 %v1098, %v556
        %v1103 = vrot.slane %v1099, 1
        %v1104 = vrot.slane %v1100, 1
        %v1107 = vadd.f32 %v1096, %v1103
        %v1108 = vadd.f32 %v1097, %v1104
        %s1109 = sld [smem:[#allocation6 + $0x18]]
        %s1110 = sld [smem:[#allocation6 + $0x49]]
        %v1111 = vstv %s1109
        %v1112 = vmul.f32 %v1111, %v567
        %v1113 = vmul.f32 %v1111, %v568
        %v1114 = vadd.f32 %v1107, %v1112
        %v1115 = vadd.f32 %v1108, %v1113
        %v1116 = vstv %s1110
        %v1117 = vmul.f32 %v1116, %v567
        %v1118 = vmul.f32 %v1116, %v568
        %v1121 = vrot.slane %v1117, 1
        %v1122 = vrot.slane %v1118, 1
        %v1125 = vadd.f32 %v1114, %v1121
        %v1126 = vadd.f32 %v1115, %v1122
        %s1127 = sld [smem:[#allocation6 + $0x19]]
        %s1128 = sld [smem:[#allocation6 + $0x4a]]
        %v1129 = vstv %s1127
        %v1130 = vmul.f32 %v1129, %v590
        %v1131 = vmul.f32 %v1129, %v591
        %v1132 = vadd.f32 %v1125, %v1130
        %v1133 = vadd.f32 %v1126, %v1131
        %v1134 = vstv %s1128
        %v1135 = vmul.f32 %v1134, %v590
        %v1136 = vmul.f32 %v1134, %v591
        %v1139 = vrot.slane %v1135, 1
        %v1140 = vrot.slane %v1136, 1
        %v1143 = vadd.f32 %v1132, %v1139
        %v1144 = vadd.f32 %v1133, %v1140
        %s1145 = sld [smem:[#allocation6 + $0x1a]]
        %s1146 = sld [smem:[#allocation6 + $0x4b]]
        %v1147 = vstv %s1145
        %v1148 = vmul.f32 %v1147, %v613
        %v1149 = vmul.f32 %v1147, %v614
        %v1150 = vadd.f32 %v1143, %v1148
        %v1151 = vadd.f32 %v1144, %v1149
        %v1152 = vstv %s1146
        %v1153 = vmul.f32 %v1152, %v613
        %v1154 = vmul.f32 %v1152, %v614
        %v1157 = vrot.slane %v1153, 1
        %v1158 = vrot.slane %v1154, 1
        %v1161 = vadd.f32 %v1150, %v1157
        %v1162 = vadd.f32 %v1151, %v1158
        %s1163 = sld [smem:[#allocation6 + $0x1b]]
        %s1164 = sld [smem:[#allocation6 + $0x4c]]
        %v1165 = vstv %s1163
        %v1166 = vmul.f32 %v1165, %v636
        %v1167 = vmul.f32 %v1165, %v637
        %v1168 = vadd.f32 %v1161, %v1166
        %v1169 = vadd.f32 %v1162, %v1167
        %v1170 = vstv %s1164
        %v1171 = vmul.f32 %v1170, %v636
        %v1172 = vmul.f32 %v1170, %v637
        %v1175 = vrot.slane %v1171, 1
        %v1176 = vrot.slane %v1172, 1
        %v1179 = vadd.f32 %v1168, %v1175
        %v1180 = vadd.f32 %v1169, %v1176
        %v1181 = vadd.f32 %v1053, %v1179
        %v1182 = vadd.f32 %v1054, %v1180
        %s1183 = sld [smem:[#allocation6 + $0x1c]]
        %s1184 = sld [smem:[#allocation6 + $0x4d]]
        %v1185 = vstv %s1183
        %v1186 = vmul.f32 %v1185, %v510
        %v1187 = vmul.f32 %v1185, %v511
        %v1188 = vadd.f32 %v1186, 0.0
        %v1189 = vadd.f32 %v1187, 0.0
        %v1190 = vstv %s1184
        %v1191 = vmul.f32 %v1190, %v510
        %v1192 = vmul.f32 %v1190, %v511
        %v1195 = vrot.slane %v1191, 1
        %v1196 = vrot.slane %v1192, 1
        %v1199 = vadd.f32 %v1188, %v1195
        %v1200 = vadd.f32 %v1189, %v1196
        %s1201 = sld [smem:[#allocation6 + $0x1d]]
        %s1202 = sld [smem:[#allocation6 + $0x4e]]
        %v1203 = vstv %s1201
        %v1204 = vmul.f32 %v1203, %v532
        %v1205 = vmul.f32 %v1203, %v533
        %v1206 = vadd.f32 %v1199, %v1204
        %v1207 = vadd.f32 %v1200, %v1205
        %v1208 = vstv %s1202
        %v1209 = vmul.f32 %v1208, %v532
        %v1210 = vmul.f32 %v1208, %v533
        %v1213 = vrot.slane %v1209, 1
        %v1214 = vrot.slane %v1210, 1
        %v1217 = vadd.f32 %v1206, %v1213
        %v1218 = vadd.f32 %v1207, %v1214
        %s1219 = sld [smem:[#allocation6 + $0x1e]]
        %s1220 = sld [smem:[#allocation6 + $0x4f]]
        %v1221 = vstv %s1219
        %v1222 = vmul.f32 %v1221, %v555
        %v1223 = vmul.f32 %v1221, %v556
        %v1224 = vadd.f32 %v1217, %v1222
        %v1225 = vadd.f32 %v1218, %v1223
        %v1226 = vstv %s1220
        %v1227 = vmul.f32 %v1226, %v555
        %v1228 = vmul.f32 %v1226, %v556
        %v1231 = vrot.slane %v1227, 1
        %v1232 = vrot.slane %v1228, 1
        %v1235 = vadd.f32 %v1224, %v1231
        %v1236 = vadd.f32 %v1225, %v1232
        %s1237 = sld [smem:[#allocation6 + $0x1f]]
        %s1238 = sld [smem:[#allocation6 + $0x50]]
        %v1239 = vstv %s1237
        %v1240 = vmul.f32 %v1239, %v567
        %v1241 = vmul.f32 %v1239, %v568
        %v1242 = vadd.f32 %v1235, %v1240
        %v1243 = vadd.f32 %v1236, %v1241
        %v1244 = vstv %s1238
        %v1245 = vmul.f32 %v1244, %v567
        %v1246 = vmul.f32 %v1244, %v568
        %v1249 = vrot.slane %v1245, 1
        %v1250 = vrot.slane %v1246, 1
        %v1253 = vadd.f32 %v1242, %v1249
        %v1254 = vadd.f32 %v1243, %v1250
        %s1255 = sld [smem:[#allocation6 + $0x20]]
        %s1256 = sld [smem:[#allocation6 + $0x51]]
        %v1257 = vstv %s1255
        %v1258 = vmul.f32 %v1257, %v590
        %v1259 = vmul.f32 %v1257, %v591
        %v1260 = vadd.f32 %v1253, %v1258
        %v1261 = vadd.f32 %v1254, %v1259
        %v1262 = vstv %s1256
        %v1263 = vmul.f32 %v1262, %v590
        %v1264 = vmul.f32 %v1262, %v591
        %v1267 = vrot.slane %v1263, 1
        %v1268 = vrot.slane %v1264, 1
        %v1271 = vadd.f32 %v1260, %v1267
        %v1272 = vadd.f32 %v1261, %v1268
        %s1273 = sld [smem:[#allocation6 + $0x21]]
        %s1274 = sld [smem:[#allocation6 + $0x52]]
        %v1275 = vstv %s1273
        %v1276 = vmul.f32 %v1275, %v613
        %v1277 = vmul.f32 %v1275, %v614
        %v1278 = vadd.f32 %v1271, %v1276
        %v1279 = vadd.f32 %v1272, %v1277
        %v1280 = vstv %s1274
        %v1281 = vmul.f32 %v1280, %v613
        %v1282 = vmul.f32 %v1280, %v614
        %v1285 = vrot.slane %v1281, 1
        %v1286 = vrot.slane %v1282, 1
        %v1289 = vadd.f32 %v1278, %v1285
        %v1290 = vadd.f32 %v1279, %v1286
        %s1291 = sld [smem:[#allocation6 + $0x22]]
        %s1292 = sld [smem:[#allocation6 + $0x53]]
        %v1293 = vstv %s1291
        %v1294 = vmul.f32 %v1293, %v636
        %v1295 = vmul.f32 %v1293, %v637
        %v1296 = vadd.f32 %v1289, %v1294
        %v1297 = vadd.f32 %v1290, %v1295
        %v1298 = vstv %s1292
        %v1299 = vmul.f32 %v1298, %v636
        %v1300 = vmul.f32 %v1298, %v637
        %v1303 = vrot.slane %v1299, 1
        %v1304 = vrot.slane %v1300, 1
        %v1307 = vadd.f32 %v1296, %v1303
        %v1308 = vadd.f32 %v1297, %v1304
        %1311 = vrot.lane.b32.xlu0 %v1307, 112
        %v1312 = vpop.permute.xlu0 %1311
        %1313 = vrot.lane.b32.xlu0 %v1308, 112
        %v1314 = vpop.permute.xlu0 %1313
        %vm1315 = vcmask 916480
        %v1316 = vsel %vm1315, %v1312, %v1314
        %v1319 = vsel %vm1315, %v1314, 0.0
        %v1320 = vadd.f32 %v1181, %v1316
        %v1321 = vadd.f32 %v1182, %v1319
        %s1322 = sld [smem:[#allocation6 + $0x23]]
        %s1323 = sld [smem:[#allocation6 + $0x54]]
        %v1324 = vstv %s1322
        %v1325 = vmul.f32 %v1324, %v510
        %v1326 = vmul.f32 %v1324, %v511
        %v1327 = vadd.f32 %v1325, 0.0
        %v1328 = vadd.f32 %v1326, 0.0
        %v1329 = vstv %s1323
        %v1330 = vmul.f32 %v1329, %v510
        %v1331 = vmul.f32 %v1329, %v511
        %v1334 = vrot.slane %v1330, 1
        %v1335 = vrot.slane %v1331, 1
        %v1338 = vadd.f32 %v1327, %v1334
        %v1339 = vadd.f32 %v1328, %v1335
        %s1340 = sld [smem:[#allocation6 + $0x24]]
        %s1341 = sld [smem:[#allocation6 + $0x55]]
        %v1342 = vstv %s1340
        %v1343 = vmul.f32 %v1342, %v532
        %v1344 = vmul.f32 %v1342, %v533
        %v1345 = vadd.f32 %v1338, %v1343
        %v1346 = vadd.f32 %v1339, %v1344
        %v1347 = vstv %s1341
        %v1348 = vmul.f32 %v1347, %v532
        %v1349 = vmul.f32 %v1347, %v533
        %v1352 = vrot.slane %v1348, 1
        %v1353 = vrot.slane %v1349, 1
        %v1356 = vadd.f32 %v1345, %v1352
        %v1357 = vadd.f32 %v1346, %v1353
        %s1358 = sld [smem:[#allocation6 + $0x25]]
        %s1359 = sld [smem:[#allocation6 + $0x56]]
        %v1360 = vstv %s1358
        %v1361 = vmul.f32 %v1360, %v555
        %v1362 = vmul.f32 %v1360, %v556
        %v1363 = vadd.f32 %v1356, %v1361
        %v1364 = vadd.f32 %v1357, %v1362
        %v1365 = vstv %s1359
        %v1366 = vmul.f32 %v1365, %v555
        %v1367 = vmul.f32 %v1365, %v556
        %v1370 = vrot.slane %v1366, 1
        %v1371 = vrot.slane %v1367, 1
        %v1374 = vadd.f32 %v1363, %v1370
        %v1375 = vadd.f32 %v1364, %v1371
        %s1376 = sld [smem:[#allocation6 + $0x26]]
        %s1377 = sld [smem:[#allocation6 + $0x57]]
        %v1378 = vstv %s1376
        %v1379 = vmul.f32 %v1378, %v567
        %v1380 = vmul.f32 %v1378, %v568
        %v1381 = vadd.f32 %v1374, %v1379
        %v1382 = vadd.f32 %v1375, %v1380
        %v1383 = vstv %s1377
        %v1384 = vmul.f32 %v1383, %v567
        %v1385 = vmul.f32 %v1383, %v568
        %v1388 = vrot.slane %v1384, 1
        %v1389 = vrot.slane %v1385, 1
        %v1392 = vadd.f32 %v1381, %v1388
        %v1393 = vadd.f32 %v1382, %v1389
        %s1394 = sld [smem:[#allocation6 + $0x27]]
        %s1395 = sld [smem:[#allocation6 + $0x58]]
        %v1396 = vstv %s1394
        %v1397 = vmul.f32 %v1396, %v590
        %v1398 = vmul.f32 %v1396, %v591
        %v1399 = vadd.f32 %v1392, %v1397
        %v1400 = vadd.f32 %v1393, %v1398
        %v1401 = vstv %s1395
        %v1402 = vmul.f32 %v1401, %v590
        %v1403 = vmul.f32 %v1401, %v591
        %v1406 = vrot.slane %v1402, 1
        %v1407 = vrot.slane %v1403, 1
        %v1410 = vadd.f32 %v1399, %v1406
        %v1411 = vadd.f32 %v1400, %v1407
        %s1412 = sld [smem:[#allocation6 + $0x28]]
        %s1413 = sld [smem:[#allocation6 + $0x59]]
        %v1414 = vstv %s1412
        %v1415 = vmul.f32 %v1414, %v613
        %v1416 = vmul.f32 %v1414, %v614
        %v1417 = vadd.f32 %v1410, %v1415
        %v1418 = vadd.f32 %v1411, %v1416
        %v1419 = vstv %s1413
        %v1420 = vmul.f32 %v1419, %v613
        %v1421 = vmul.f32 %v1419, %v614
        %v1424 = vrot.slane %v1420, 1
        %v1425 = vrot.slane %v1421, 1
        %v1428 = vadd.f32 %v1417, %v1424
        %v1429 = vadd.f32 %v1418, %v1425
        %s1430 = sld [smem:[#allocation6 + $0x29]]
        %s1431 = sld [smem:[#allocation6 + $0x5a]]
        %v1432 = vstv %s1430
        %v1433 = vmul.f32 %v1432, %v636
        %v1434 = vmul.f32 %v1432, %v637
        %v1435 = vadd.f32 %v1428, %v1433
        %v1436 = vadd.f32 %v1429, %v1434
        %v1437 = vstv %s1431
        %v1438 = vmul.f32 %v1437, %v636
        %v1439 = vmul.f32 %v1437, %v637
        %v1442 = vrot.slane %v1438, 1
        %v1443 = vrot.slane %v1439, 1
        %v1446 = vadd.f32 %v1435, %v1442
        %v1447 = vadd.f32 %v1436, %v1443
        %1450 = vrot.lane.b32.xlu0 %v1446, 96
        %v1451 = vpop.permute.xlu0 %1450
        %1452 = vrot.lane.b32.xlu0 %v1447, 96
        %v1453 = vpop.permute.xlu0 %1452
        %vm1454 = vcmask 785408
        %v1455 = vsel %vm1454, %v1451, %v1453
        %v1458 = vsel %vm1454, %v1453, 0.0
        %v1459 = vadd.f32 %v1320, %v1455
        %v1460 = vadd.f32 %v1321, %v1458
        %s1461 = sld [smem:[#allocation6 + $0x2a]]
        %s1462 = sld [smem:[#allocation6 + $0x5b]]
        %v1463 = vstv %s1461
        %v1464 = vmul.f32 %v1463, %v510
        %v1465 = vmul.f32 %v1463, %v511
        %v1466 = vadd.f32 %v1464, 0.0
        %v1467 = vadd.f32 %v1465, 0.0
        %v1468 = vstv %s1462
        %v1469 = vmul.f32 %v1468, %v510
        %v1470 = vmul.f32 %v1468, %v511
        %v1473 = vrot.slane %v1469, 1
        %v1474 = vrot.slane %v1470, 1
        %v1477 = vadd.f32 %v1466, %v1473
        %v1478 = vadd.f32 %v1467, %v1474
        %s1479 = sld [smem:[#allocation6 + $0x2b]]
        %s1480 = sld [smem:[#allocation6 + $0x5c]]
        %v1481 = vstv %s1479
        %v1482 = vmul.f32 %v1481, %v532
        %v1483 = vmul.f32 %v1481, %v533
        %v1484 = vadd.f32 %v1477, %v1482
        %v1485 = vadd.f32 %v1478, %v1483
        %v1486 = vstv %s1480
        %v1487 = vmul.f32 %v1486, %v532
        %v1488 = vmul.f32 %v1486, %v533
        %v1491 = vrot.slane %v1487, 1
        %v1492 = vrot.slane %v1488, 1
        %v1495 = vadd.f32 %v1484, %v1491
        %v1496 = vadd.f32 %v1485, %v1492
        %s1497 = sld [smem:[#allocation6 + $0x2c]]
        %s1498 = sld [smem:[#allocation6 + $0x5d]]
        %v1499 = vstv %s1497
        %v1500 = vmul.f32 %v1499, %v555
        %v1501 = vmul.f32 %v1499, %v556
        %v1502 = vadd.f32 %v1495, %v1500
        %v1503 = vadd.f32 %v1496, %v1501
        %v1504 = vstv %s1498
        %v1505 = vmul.f32 %v1504, %v555
        %v1506 = vmul.f32 %v1504, %v556
        %v1509 = vrot.slane %v1505, 1
        %v1510 = vrot.slane %v1506, 1
        %v1513 = vadd.f32 %v1502, %v1509
        %v1514 = vadd.f32 %v1503, %v1510
        %s1515 = sld [smem:[#allocation6 + $0x2d]]
        %s1516 = sld [smem:[#allocation6 + $0x5e]]
        %v1517 = vstv %s1515
        %v1518 = vmul.f32 %v1517, %v567
        %v1519 = vmul.f32 %v1517, %v568
        %v1520 = vadd.f32 %v1513, %v1518
        %v1521 = vadd.f32 %v1514, %v1519
        %v1522 = vstv %s1516
        %v1523 = vmul.f32 %v1522, %v567
        %v1524 = vmul.f32 %v1522, %v568
        %v1527 = vrot.slane %v1523, 1
        %v1528 = vrot.slane %v1524, 1
        %v1531 = vadd.f32 %v1520, %v1527
        %v1532 = vadd.f32 %v1521, %v1528
        %s1533 = sld [smem:[#allocation6 + $0x2e]]
        %s1534 = sld [smem:[#allocation6 + $0x5f]]
        %v1535 = vstv %s1533
        %v1536 = vmul.f32 %v1535, %v590
        %v1537 = vmul.f32 %v1535, %v591
        %v1538 = vadd.f32 %v1531, %v1536
        %v1539 = vadd.f32 %v1532, %v1537
        %v1540 = vstv %s1534
        %v1541 = vmul.f32 %v1540, %v590
        %v1542 = vmul.f32 %v1540, %v591
        %v1545 = vrot.slane %v1541, 1
        %v1546 = vrot.slane %v1542, 1
        %v1549 = vadd.f32 %v1538, %v1545
        %v1550 = vadd.f32 %v1539, %v1546
        %s1551 = sld [smem:[#allocation6 + $0x2f]]
        %s1552 = sld [smem:[#allocation6 + $0x60]]
        %v1553 = vstv %s1551
        %v1554 = vmul.f32 %v1553, %v613
        %v1555 = vmul.f32 %v1553, %v614
        %v1556 = vadd.f32 %v1549, %v1554
        %v1557 = vadd.f32 %v1550, %v1555
        %v1558 = vstv %s1552
        %v1559 = vmul.f32 %v1558, %v613
        %v1560 = vmul.f32 %v1558, %v614
        %v1563 = vrot.slane %v1559, 1
        %v1564 = vrot.slane %v1560, 1
        %v1567 = vadd.f32 %v1556, %v1563
        %v1568 = vadd.f32 %v1557, %v1564
        %s1569 = sld [smem:[#allocation6 + $0x30]]
        %s1570 = sld [smem:[#allocation6 + $0x61]]
        %v1571 = vstv %s1569
        %v1572 = vmul.f32 %v1571, %v636
        %v1573 = vmul.f32 %v1571, %v637
        %v1574 = vadd.f32 %v1567, %v1572
        %v1575 = vadd.f32 %v1568, %v1573
        %v1576 = vstv %s1570
        %v1577 = vmul.f32 %v1576, %v636
        %v1578 = vmul.f32 %v1576, %v637
        %v1581 = vrot.slane %v1577, 1
        %v1582 = vrot.slane %v1578, 1
        %v1585 = vadd.f32 %v1574, %v1581
        %v1586 = vadd.f32 %v1575, %v1582
        %1589 = vrot.lane.b32.xlu0 %v1585, 80
        %v1590 = vpop.permute.xlu0 %1589
        %1591 = vrot.lane.b32.xlu0 %v1586, 80
        %v1592 = vpop.permute.xlu0 %1591
        %vm1593 = vcmask 654336
        %v1594 = vsel %vm1593, %v1590, %v1592
        %v1597 = vsel %vm1593, %v1592, 0.0
        %v1598 = vadd.f32 %v1459, %v1594
        %v1599 = vadd.f32 %v1460, %v1597
        %v1600 = vxor.u32 %v1598, 2147483648
        %v1601 = vxor.u32 %v1599, 2147483648
        %v1602 = vmul.f32 %v1600, 1.442695
        %v1603 = vpow.pop %v1602
        %v1604 = vmul.f32 %v1601, 1.442695
        %v1605 = vpow.pop %v1604
        %v1606 = vadd.f32 %v1603, 1.0
        %v1607 = vadd.f32 %v1605, 1.0
        %v1608 = vrcp.pop %v1606
        %v1609 = vmul.f32 1.0, %v1608
        %v1610 = vrcp.pop %v1607
        %v1611 = vmul.f32 1.0, %v1610
        %v1612 = vlaneseq
        %v1613 = vshrl.u32 %v1612, 7
        %v1614 = vsub.s32 0, %v1613
        %v1615 = vrot.slane %v1609, %v1614
        %v1616 = vlaneseq
        %v1617 = vshrl.u32 %v1616, 7
        %v1618 = vsub.s32 0, %v1617
        %v1619 = vrot.slane %v1611, %v1618
        %v1620 = vmul.f32 %v411, %v1615
        %v1621 = vmul.f32 %v412, %v1619
        %v1622 = vmul.f32 %v413, %v1615
        %v1623 = vmul.f32 %v414, %v1619
        %v1624 = vmul.f32 %v415, %v1615
        %v1625 = vmul.f32 %v416, %v1619
        %v1626 = vmul.f32 %v417, %v1615
        %v1627 = vmul.f32 %v418, %v1619
        %1628 = vst [vmem:[%s229] sm:$0xff] %v1620
        %1629 = vst [vmem:[%s229 + $0x8] sm:$0xff] %v1621
        %1630 = vst [vmem:[%s229 + $0x10] sm:$0xff] %v1622
        %1631 = vst [vmem:[%s229 + $0x18] sm:$0xff] %v1623
        %1632 = vst [vmem:[%s229 + $0x20] sm:$0xff] %v1624
        %1633 = vst [vmem:[%s229 + $0x28] sm:$0xff] %v1625
        %1634 = vst [vmem:[%s229 + $0x30] sm:$0xff] %v1626
        %1635 = vst [vmem:[%s229 + $0x38] sm:$0xff] %v1627
        %s1636 = sand.u32 %s119, 1
        %s1637 = scalar_lea.sflag [#allocation4], %s1636
        %s1638 = sand.u32 %s119, 1
        %s1639 = smul.addr %s1638, 64
        %s1640 = scalar_lea.vmem [#allocation7], %s1639
        // Predicated region
        $region45: #{tpu_custom_call.1} parent=35 // pred_check
          %p1641 = pneg %p129
        $region46: #{tpu_custom_call.1} parent=35 // pred_check_branch
          %1643 = sbr.rel (%p1641) target = $region48
        $region47: #{tpu_custom_call.1} parent=35 // pred_region
          %s1645 = ssub.s32 1024, 1024
          %1646 = vsyncadd %s1637, %s1645
          %s1647 = smul.addr %s22, 8
          %s1648 = smul.addr %s1647, 128
          %s1649 = scalar_lea.hbm %s4, %s1648
          %s1650 = sshll.u32 %s1640, 4
          %s1651 = int_to_ptr.vmem [resolvable:$true] %s1650
          %1656 = dma.vmem_to_hbm [thread:$0]  %s1651, 1024, %s1649, %s1637, 256, 256, 16
        $region48: #{tpu_custom_call.1} parent=35 // pred_fallthru
          _
      $region36: #{tpu_custom_call.1} parent=5 // pred_fallthru
        _
      %p1657 = scmp.le.s32.totalorder 2, %s17
      // Predicated region
      $region49: #{tpu_custom_call.1} parent=5 // pred_check
        %p1658 = pneg %p1657
      $region50: #{tpu_custom_call.1} parent=5 // pred_check_branch
        %1660 = sbr.rel (%p1658) target = $region52
      $region51: #{tpu_custom_call.1} parent=5 // pred_region
        %s1661 = ssub.s32 %s17, 2
        // Predicated region
        $region53: #{tpu_custom_call.1} parent=51 // pred_check
          %p1662 = pneg %p135
        $region54: #{tpu_custom_call.1} parent=51 // pred_check_branch
          %1664 = sbr.rel (%p1662) target = $region56
        $region55: #{tpu_custom_call.1} parent=51 // pred_region
          %s1665 = sand.u32 %s120, 1
          %s1666 = scalar_lea.sflag [#allocation4], %s1665
          %s1667 = sand.u32 %s120, 1
          %s1668 = smul.addr %s1667, 64
          %s1669 = scalar_lea.vmem [#allocation7], %s1668
          %1670 = dma.done %s1666, 1024
        $region56: #{tpu_custom_call.1} parent=51 // pred_fallthru
          _
      $region52: #{tpu_custom_call.1} parent=5 // pred_fallthru
        _
    $region6: #{tpu_custom_call.1} parent=1 // loop_footer
      %s21 = sadd.s32 1, %s17
    $region7: #{tpu_custom_call.1} parent=1 // loop_footer_branch
      %16 = sbr.rel target = $region3
    $region8: #{tpu_custom_call.1} parent=1 // loop_exit
      _
    %1671 = vsyncpa [#allocation3], 1
    %s1672 = scalar_lea.sflag [#allocation3], 1
    %1673 = vsyncpa %s1672, 1
    %1674 = vsyncpa [#allocation4], 1
    %s1675 = scalar_lea.sflag [#allocation4], 1
    %1676 = vsyncpa %s1675, 1
    %1677 = vsyncpa [#allocation5], 1
    %s1678 = scalar_lea.sflag [#allocation5], 1
    %1679 = vsyncpa %s1678, 1

</llo_original>
